<compile_context>
chip_gen: v7x
topology: tpu7x:2x2x1
jax: 0.10.0
libtpu: 0.0.40
codegen_flags: <defaults>
</compile_context>

<pallas_src>
import functools

import jax
import jax.numpy as jnp
from jax import lax
from jax.experimental import pallas as pl
from jax.experimental.pallas import tpu as pltpu

EPS = 1e-5                              # nn.BatchNorm1d default eps
_VMEM_LIMIT = 48 * 1024 * 1024          # < v7x's 64 MiB physical VMEM
_FUSED_VMEM_BYTES = 8 * 1024 * 1024     # budget for fused caches + I/O
_FUSED_MAX_BATCH = 64                   # bound on Python unrolling over batch
_LANE_TARGET = 16384                    # per-step lane width for streaming path


# ---------------------------------------------------------------------------
# Fully fused path: one pallas_call, grid=(1,), everything VMEM-resident.
# ---------------------------------------------------------------------------
def _fused_kernel(x_ref, w1t_ref, w2t_ref, wot_ref, g1_ref, b1_ref,
                  g2_ref, b2_ref, bo_ref, o_ref, z1c_ref, z2c_ref,
                  *, n_rows, hw, needs_mask):
    """Whole forward in a single kernel invocation.

    x_ref:        (N, C, HWp)  input (NCHW with H*W flattened on lanes)
    z1c/z2c_ref:  (N, F1, HWp) f32 VMEM caches of the pre-norm activations
    o_ref:        (N, FO, HWp) output, still NCHW layout
    BatchNorm uses training-mode (biased) batch statistics over all n_rows
    valid rows; padded lane columns are masked out of the statistics.
    """
    n_batch = x_ref.shape[0]
    hwp = x_ref.shape[2]
    f1 = w2t_ref.shape[0]
    inv_rows = 1.0 / n_rows

    if needs_mask:
        col = lax.broadcasted_iota(jnp.int32, (1, hwp), 1)
        mask = (col < hw).astype(jnp.float32)            # (1, HWp) validity
    else:
        mask = None

    def masked(v):
        return v * mask if mask is not None else v

    # ---- layer 1: z1 = W1^T x, cached; accumulate per-feature sums ------
    sum1 = jnp.zeros((f1, 1), jnp.float32)
    for n in range(n_batch):
        z = jnp.dot(w1t_ref[...], x_ref[n].astype(jnp.bfloat16),
                    preferred_element_type=jnp.float32)          # (F1, HWp)
        z1c_ref[n] = z
        sum1 = sum1 + jnp.sum(masked(z), axis=1, keepdims=True)
    mean1 = sum1 * inv_rows

    # Centered (numerically safe) biased variance from the cached z1.
    ssq1 = jnp.zeros((f1, 1), jnp.float32)
    for n in range(n_batch):
        d = masked(z1c_ref[n] - mean1)
        ssq1 = ssq1 + jnp.sum(d * d, axis=1, keepdims=True)
    s1 = g1_ref[...] * lax.rsqrt(ssq1 * inv_rows + EPS)
    t1 = b1_ref[...] - mean1 * s1

    # ---- layer 2: h1 = relu(BN1(z1)), z2 = W2^T h1, cached + stats -------
    sum2 = jnp.zeros((f1, 1), jnp.float32)
    for n in range(n_batch):
        h1 = jnp.maximum(z1c_ref[n] * s1 + t1, 0.0).astype(jnp.bfloat16)
        z = jnp.dot(w2t_ref[...], h1, preferred_element_type=jnp.float32)
        z2c_ref[n] = z
        sum2 = sum2 + jnp.sum(masked(z), axis=1, keepdims=True)
    mean2 = sum2 * inv_rows

    ssq2 = jnp.zeros((f1, 1), jnp.float32)
    for n in range(n_batch):
        d = masked(z2c_ref[n] - mean2)
        ssq2 = ssq2 + jnp.sum(d * d, axis=1, keepdims=True)
    s2 = g2_ref[...] * lax.rsqrt(ssq2 * inv_rows + EPS)
    t2 = b2_ref[...] - mean2 * s2

    # ---- output layer: y = Wo^T relu(BN2(z2)) + bo ------------------------
    for n in range(n_batch):
        h2 = jnp.maximum(z2c_ref[n] * s2 + t2, 0.0).astype(jnp.bfloat16)
        y = jnp.dot(wot_ref[...], h2,
                    preferred_element_type=jnp.float32) + bo_ref[...]
        o_ref[n] = y.astype(o_ref.dtype)


def _fused_forward(x3, w1t, w2t, wot, g1c, b1c, g2c, b2c, boc,
                   n_rows, hw, out_dtype):
    N, C, HWp = x3.shape
    F1 = w2t.shape[0]
    FO = wot.shape[0]

    def whole(a):
        nd = a.ndim
        return pl.BlockSpec(a.shape, lambda i: (0,) * nd)

    return pl.pallas_call(
        functools.partial(_fused_kernel, n_rows=float(n_rows), hw=hw,
                          needs_mask=(HWp != hw)),
        out_shape=jax.ShapeDtypeStruct((N, FO, HWp), out_dtype),
        grid=(1,),
        in_specs=[whole(x3), whole(w1t), whole(w2t), whole(wot),
                  whole(g1c), whole(b1c), whole(g2c), whole(b2c), whole(boc)],
        out_specs=pl.BlockSpec((N, FO, HWp), lambda i: (0, 0, 0)),
        scratch_shapes=[pltpu.VMEM((N, F1, HWp), jnp.float32),
                        pltpu.VMEM((N, F1, HWp), jnp.float32)],
        compiler_params=pltpu.CompilerParams(
            dimension_semantics=("arbitrary",),
            vmem_limit_bytes=_VMEM_LIMIT),
    )(x3, w1t, w2t, wot, g1c, b1c, g2c, b2c, boc)


# ---------------------------------------------------------------------------
# Streaming multi-pass path (fallback for large M = N*H*W).
# ---------------------------------------------------------------------------
def _mask_cols(z, t, tile, hw):
    """Zero out columns that correspond to spatial padding (col >= hw)."""
    col = t * tile + lax.broadcasted_iota(jnp.int32, (1, z.shape[1]), 1)
    return z * (col < hw).astype(z.dtype)


def _stats1_kernel(x_ref, w1t_ref, g1_ref, b1_ref,
                   w1f_ref, t1_ref, sum_ref, ssq_ref,
                   *, rows, hw, tile, needs_mask):
    n, t = pl.program_id(0), pl.program_id(1)

    @pl.when(jnp.logical_and(n == 0, t == 0))
    def _():
        sum_ref[...] = jnp.zeros_like(sum_ref)
        ssq_ref[...] = jnp.zeros_like(ssq_ref)

    xb = x_ref[0].astype(jnp.bfloat16)                               # (C, T)
    z = jnp.dot(w1t_ref[...], xb, preferred_element_type=jnp.float32)
    zm = _mask_cols(z, t, tile, hw) if needs_mask else z
    # Lane-wide f32 partials: plain VPU adds per step, single XLU reduce at
    # finalize (keeps the 2-unit XLU off the per-step critical path).
    sum_ref[...] += zm
    ssq_ref[...] += zm * z

    @pl.when(jnp.logical_and(n == pl.num_programs(0) - 1,
                             t == pl.num_programs(1) - 1))
    def _():
        inv = 1.0 / rows
        mean = jnp.sum(sum_ref[...], axis=1, keepdims=True) * inv
        # Uncentered variance; fine in f32 with wide partials for the shapes
        # this path serves.  TODO(synk): Welford/shifted accumulation if used
        # with extreme means / row counts.
        var = jnp.sum(ssq_ref[...], axis=1, keepdims=True) * inv - mean * mean
        scale = g1_ref[...] * lax.rsqrt(var + EPS)
        t1_ref[...] = b1_ref[...] - mean * scale
        # Fold the BN scale into the layer-1 weights for the next passes.
        w1f_ref[...] = (w1t_ref[...].astype(jnp.float32)
                        * scale).astype(jnp.bfloat16)


def _stats2_kernel(x_ref, w1f_ref, t1_ref, w2t_ref, g2_ref, b2_ref,
                   w2f_ref, t2_ref, sum_ref, ssq_ref,
                   *, rows, hw, tile, needs_mask):
    n, t = pl.program_id(0), pl.program_id(1)

    @pl.when(jnp.logical_and(n == 0, t == 0))
    def _():
        sum_ref[...] = jnp.zeros_like(sum_ref)
        ssq_ref[...] = jnp.zeros_like(ssq_ref)

    xb = x_ref[0].astype(jnp.bfloat16)
    z1 = jnp.dot(w1f_ref[...], xb, preferred_element_type=jnp.float32)
    h1 = jnp.maximum(z1 + t1_ref[...], 0.0).astype(jnp.bfloat16)
    z = jnp.dot(w2t_ref[...], h1, preferred_element_type=jnp.float32)
    zm = _mask_cols(z, t, tile, hw) if needs_mask else z
    sum_ref[...] += zm
    ssq_ref[...] += zm * z

    @pl.when(jnp.logical_and(n == pl.num_programs(0) - 1,
                             t == pl.num_programs(1) - 1))
    def _():
        inv = 1.0 / rows
        mean = jnp.sum(sum_ref[...], axis=1, keepdims=True) * inv
        var = jnp.sum(ssq_ref[...], axis=1, keepdims=True) * inv - mean * mean
        scale = g2_ref[...] * lax.rsqrt(var + EPS)
        t2_ref[...] = b2_ref[...] - mean * scale
        w2f_ref[...] = (w2t_ref[...].astype(jnp.float32)
                        * scale).astype(jnp.bfloat16)


def _final_kernel(x_ref, w1f_ref, t1_ref, w2f_ref, t2_ref, wot_ref, bo_ref,
                  o_ref):
    xb = x_ref[0].astype(jnp.bfloat16)                                # (C, T)
    z1 = jnp.dot(w1f_ref[...], xb, preferred_element_type=jnp.float32)
    h1 = jnp.maximum(z1 + t1_ref[...], 0.0).astype(jnp.bfloat16)
    z2 = jnp.dot(w2f_ref[...], h1, preferred_element_type=jnp.float32)
    h2 = jnp.maximum(z2 + t2_ref[...], 0.0).astype(jnp.bfloat16)
    y = jnp.dot(wot_ref[...], h2,
                preferred_element_type=jnp.float32) + bo_ref[...]
    o_ref[0] = y.astype(o_ref.dtype)            # lane-dense (FO, T) store


def _pick_tile(hwp, target=_LANE_TARGET):
    """Largest lane-aligned tile (<= target) dividing the padded spatial dim."""
    if hwp <= target:
        return hwp
    for cand in (16384, 8192, 4096, 2048, 1024, 512, 256, 128):
        if cand <= target and hwp % cand == 0:
            return cand
    return 128  # hwp is always a multiple of 128 after padding


def _multipass_forward(x3, w1t, w2t, wot, g1c, b1c, g2c, b2c, boc,
                       n_rows, hw, out_dtype):
    N, C, HWp = x3.shape
    F1 = w2t.shape[0]
    FO = wot.shape[0]
    tile = _pick_tile(HWp)
    grid = (N, HWp // tile)
    needs_mask = (HWp != hw)

    x_spec = pl.BlockSpec((1, C, tile), lambda n, t: (n, 0, t))
    out_spec = pl.BlockSpec((1, FO, tile), lambda n, t: (n, 0, t))

    def resident(a):
        nd = a.ndim
        # Whole-array block + constant index map -> stays VMEM resident.
        return pl.BlockSpec(a.shape, lambda n, t: (0,) * nd)

    reduce_params = pltpu.CompilerParams(
        dimension_semantics=("arbitrary", "arbitrary"),
        vmem_limit_bytes=_VMEM_LIMIT)
    parallel_params = pltpu.CompilerParams(
        dimension_semantics=("parallel", "parallel"),
        vmem_limit_bytes=_VMEM_LIMIT)

    stat_scratch = [pltpu.VMEM((F1, tile), jnp.float32),
                    pltpu.VMEM((F1, tile), jnp.float32)]

    # Pass 1: global BN1 statistics -> folded bf16 W1 + shift1.
    w1f, t1 = pl.pallas_call(
        functools.partial(_stats1_kernel, rows=float(n_rows), hw=hw,
                          tile=tile, needs_mask=needs_mask),
        out_shape=(jax.ShapeDtypeStruct((F1, C), jnp.bfloat16),
                   jax.ShapeDtypeStruct((F1, 1), jnp.float32)),
        grid=grid,
        in_specs=[x_spec, resident(w1t), resident(g1c), resident(b1c)],
        out_specs=(pl.BlockSpec((F1, C), lambda n, t: (0, 0)),
                   pl.BlockSpec((F1, 1), lambda n, t: (0, 0))),
        scratch_shapes=stat_scratch,
        compiler_params=reduce_params,
    )(x3, w1t, g1c, b1c)

    # Pass 2: recompute layer 1 (folded), BN2 statistics -> folded W2 + shift2.
    w2f, t2 = pl.pallas_call(
        functools.partial(_stats2_kernel, rows=float(n_rows), hw=hw,
                          tile=tile, needs_mask=needs_mask),
        out_shape=(jax.ShapeDtypeStruct((F1, F1), jnp.bfloat16),
                   jax.ShapeDtypeStruct((F1, 1), jnp.float32)),
        grid=grid,
        in_specs=[x_spec, resident(w1f), resident(t1),
                  resident(w2t), resident(g2c), resident(b2c)],
        out_specs=(pl.BlockSpec((F1, F1), lambda n, t: (0, 0)),
                   pl.BlockSpec((F1, 1), lambda n, t: (0, 0))),
        scratch_shapes=stat_scratch,
        compiler_params=reduce_params,
    )(x3, w1f, t1, w2t, g2c, b2c)

    # Pass 3: full forward per tile, tiles independent -> both axes parallel.
    y3 = pl.pallas_call(
        _final_kernel,
        out_shape=jax.ShapeDtypeStruct((N, FO, HWp), out_dtype),
        grid=grid,
        in_specs=[x_spec, resident(w1f), resident(t1),
                  resident(w2f), resident(t2), resident(wot), resident(boc)],
        out_specs=out_spec,
        compiler_params=parallel_params,
    )(x3, w1f, t1, w2f, t2, wot, boc)
    return y3


# ---------------------------------------------------------------------------
# Public wrapper
# ---------------------------------------------------------------------------
def mlp_forward(x_nchw, w1, g1, b1, w2, g2, b2, wo, bo, *,
                force_multipass=False):
    """quantnn MLP forward (training-mode BatchNorm).  Linear weights are
    stored (in, out); BN affine params and output bias are (1, features)."""
    N, C, H, W = x_nchw.shape
    HW = H * W
    F1 = w1.shape[1]
    FO = wo.shape[1]
    M = N * HW                               # true BN row count

    # Lane-align the spatial dim (pad with zeros; stats mask out padding).
    HWp = max(128, ((HW + 127) // 128) * 128)
    x3 = x_nchw.reshape(N, C, HW)            # NCHW -> (N, C, H*W): free reshape
    if HWp != HW:
        x3 = jnp.pad(x3, ((0, 0), (0, 0), (0, HWp - HW)))

    # Transposed (out, in) weights cast to bf16 once; BN params as columns.
    w1t = jnp.transpose(w1).astype(jnp.bfloat16)        # (F1, C)
    w2t = jnp.transpose(w2).astype(jnp.bfloat16)        # (F1, F1)
    wot = jnp.transpose(wo).astype(jnp.bfloat16)        # (FO, F1)
    g1c = g1.reshape(F1, 1).astype(jnp.float32)
    b1c = b1.reshape(F1, 1).astype(jnp.float32)
    g2c = g2.reshape(F1, 1).astype(jnp.float32)
    b2c = b2.reshape(F1, 1).astype(jnp.float32)
    boc = bo.reshape(FO, 1).astype(jnp.float32)

    # Fused single-kernel path whenever the activation caches + I/O fit a
    # conservative VMEM budget (halved relative to v5e/v6e to stay safe on
    # v7x's 64 MiB VMEM) and the batch unroll stays small.
    fused_bytes = N * HWp * (C + 2 * F1 + FO) * 4
    use_fused = (not force_multipass
                 and N <= _FUSED_MAX_BATCH
                 and fused_bytes <= _FUSED_VMEM_BYTES)

    args = (x3, w1t, w2t, wot, g1c, b1c, g2c, b2c, boc, M, HW, x_nchw.dtype)
    y3 = _fused_forward(*args) if use_fused else _multipass_forward(*args)

    if HWp != HW:
        y3 = y3[:, :, :HW]
    return y3.reshape(N, FO, H, W)           # already NCHW


# ---------------------------------------------------------------------------
# Pure-JAX reference (mirrors the PyTorch forward, training-mode BN).
# ---------------------------------------------------------------------------
def reference_forward(x_nchw, w1, g1, b1, w2, g2, b2, wo, bo,
                      matmul_dtype=jnp.float32):
    N, C, H, W = x_nchw.shape
    h = jnp.transpose(x_nchw, (0, 2, 3, 1)).reshape(-1, C)
    for w, g, b in ((w1, g1, b1), (w2, g2, b2)):
        z = jnp.dot(h.astype(matmul_dtype), w.astype(matmul_dtype),
                    preferred_element_type=jnp.float32)
        mean = jnp.mean(z, axis=0, keepdims=True)
        var = jnp.mean(jnp.square(z - mean), axis=0, keepdims=True)
        h = jnp.maximum((z - mean) * lax.rsqrt(var + EPS) * g + b, 0.0)
    y = jnp.dot(h.astype(matmul_dtype), wo.astype(matmul_dtype),
                preferred_element_type=jnp.float32) + bo
    y = y.reshape(N, H, W, -1)
    return jnp.transpose(y, (0, 3, 1, 2)).astype(x_nchw.dtype)


if __name__ == "__main__":
    # MLP(features_in=4, n_features=32, features_out=8, n_layers=3)
    N, C_in = 2, 4
    n_features, features_out = 32, 8

    key = jax.random.PRNGKey(0)
    kx, kx2, k1, k2, k3, k4, k5, k6, k7 = jax.random.split(key, 9)

    # Deterministic parameters (Linear weights stored as (in, out)).
    w1 = jax.random.normal(k1, (C_in, n_features), dtype=jnp.float32) * 0.2
    w2 = jax.random.normal(k2, (n_features, n_features), dtype=jnp.float32) * 0.1
    wo = jax.random.normal(k3, (n_features, features_out), dtype=jnp.float32) * 0.1
    bo = jax.random.normal(k4, (1, features_out), dtype=jnp.float32) * 0.05
    g1 = 1.0 + 0.1 * jax.random.normal(k5, (1, n_features), dtype=jnp.float32)
    b1 = 0.1 * jax.random.normal(k6, (1, n_features), dtype=jnp.float32)
    g2 = 1.0 + 0.1 * jax.random.normal(k7, (1, n_features), dtype=jnp.float32)
    b2 = jnp.zeros((1, n_features), dtype=jnp.float32)
    params = (w1, g1, b1, w2, g2, b2, wo, bo)

    def check(tag, y, x, tol_bf16, tol_f32):
        ref16 = reference_forward(x, *params, matmul_dtype=jnp.bfloat16)
        ref32 = reference_forward(x, *params)
        assert jnp.allclose(y, ref16, rtol=tol_bf16, atol=tol_bf16), (
            f"{tag}: mismatch vs bf16 reference, max abs diff = "
            f"{float(jnp.max(jnp.abs(y - ref16)))}")
        assert jnp.allclose(y, ref32, rtol=tol_f32, atol=tol_f32), (
            f"{tag}: mismatch vs f32 reference, max abs diff = "
            f"{float(jnp.max(jnp.abs(y - ref32)))}")

    # 1) Fused single-kernel path (the path the module's sizes actually use).
    H, W = 16, 16
    x = jax.random.normal(kx, (N, C_in, H, W), dtype=jnp.float32)
    y = jax.block_until_ready(mlp_forward(x, *params))
    assert y.shape == (N, features_out, H, W), y.shape
    check("fused", y, x, 1e-2, 5e-2)

    # 2) Streaming multi-pass fallback (large-M path), forced on the same data.
    #    Looser bf16 tolerance: it folds the BN scale into bf16 weights.
    y_mp = jax.block_until_ready(mlp_forward(x, *params, force_multipass=True))
    assert y_mp.shape == (N, features_out, H, W), y_mp.shape
    check("multipass", y_mp, x, 3e-2, 5e-2)

    # 3) Non-lane-aligned spatial size -> exercises the pad + stats-mask path.
    H2, W2 = 10, 10
    x2 = jax.random.normal(kx2, (N, C_in, H2, W2), dtype=jnp.float32)
    y2 = jax.block_until_ready(mlp_forward(x2, *params))
    assert y2.shape == (N, features_out, H2, W2), y2.shape
    check("fused-padded", y2, x2, 1e-2, 5e-2)

    print("KERNEL_OK")
</pallas_src>

<mosaic_0001>
module attributes {stable_mosaic.version = 11 : i64} {
  func.func @_fused_kernel(%arg0: i32, %arg1: memref<2x4x256xf32, #tpu.memory_space<vmem>>, %arg2: memref<32x4xbf16, #tpu.memory_space<vmem>>, %arg3: memref<32x32xbf16, #tpu.memory_space<vmem>>, %arg4: memref<8x32xbf16, #tpu.memory_space<vmem>>, %arg5: memref<32x1xf32, #tpu.memory_space<vmem>>, %arg6: memref<32x1xf32, #tpu.memory_space<vmem>>, %arg7: memref<32x1xf32, #tpu.memory_space<vmem>>, %arg8: memref<32x1xf32, #tpu.memory_space<vmem>>, %arg9: memref<8x1xf32, #tpu.memory_space<vmem>>, %arg10: memref<2x8x256xf32, #tpu.memory_space<vmem>>, %arg11: memref<2x32x256xf32, #tpu.memory_space<vmem>>, %arg12: memref<2x32x256xf32, #tpu.memory_space<vmem>>) attributes {dimension_semantics = [#tpu.dimension_semantics<arbitrary>], iteration_bounds = array<i64: 1>, scalar_prefetch = 0 : i64, scratch_operands = 2 : i64, tpu.core_type = #tpu.core_type<tc>, window_params = [{pipeline_mode = #tpu.pipeline_mode<synchronous>, transform_indices = @transform_0, window_bounds = array<i64: 2, 4, 256>}, {pipeline_mode = #tpu.pipeline_mode<synchronous>, transform_indices = @transform_1, window_bounds = array<i64: 32, 4>}, {pipeline_mode = #tpu.pipeline_mode<synchronous>, transform_indices = @transform_2, window_bounds = array<i64: 32, 32>}, {pipeline_mode = #tpu.pipeline_mode<synchronous>, transform_indices = @transform_3, window_bounds = array<i64: 8, 32>}, {pipeline_mode = #tpu.pipeline_mode<synchronous>, transform_indices = @transform_4, window_bounds = array<i64: 32, 1>}, {pipeline_mode = #tpu.pipeline_mode<synchronous>, transform_indices = @transform_5, window_bounds = array<i64: 32, 1>}, {pipeline_mode = #tpu.pipeline_mode<synchronous>, transform_indices = @transform_6, window_bounds = array<i64: 32, 1>}, {pipeline_mode = #tpu.pipeline_mode<synchronous>, transform_indices = @transform_7, window_bounds = array<i64: 32, 1>}, {pipeline_mode = #tpu.pipeline_mode<synchronous>, transform_indices = @transform_8, window_bounds = array<i64: 8, 1>}, {pipeline_mode = #tpu.pipeline_mode<synchronous>, transform_indices = @transform_9, window_bounds = array<i64: 2, 8, 256>}]} {
    %cst = arith.constant 0.000000e+00 : f32
    %0 = vector.broadcast %cst : f32 to vector<32x1xf32>
    %c0 = arith.constant 0 : index
    %c0_0 = arith.constant 0 : index
    %1 = vector.load %arg2[%c0, %c0_0] : memref<32x4xbf16, #tpu.memory_space<vmem>>, vector<32x4xbf16>
    %c0_1 = arith.constant 0 : index
    %c0_2 = arith.constant 0 : index
    %c0_3 = arith.constant 0 : index
    %2 = vector.load %arg1[%c0_1, %c0_2, %c0_3] : memref<2x4x256xf32, #tpu.memory_space<vmem>>, vector<1x4x256xf32>
    %3 = vector.shape_cast %2 : vector<1x4x256xf32> to vector<4x256xf32>
    %4 = arith.truncf %3 : vector<4x256xf32> to vector<4x256xbf16>
    %cst_4 = arith.constant dense<0.000000e+00> : vector<32x256xf32>
    %5 = tpu.matmul %1, %4, %cst_4 {dimension_numbers = #tpu.dot_dimension_numbers<[1], [0], [0], [1], [0, 0, 1, 1], [], []>} : vector<32x4xbf16>, vector<4x256xbf16>, vector<32x256xf32> -> vector<32x256xf32>
    %c0_5 = arith.constant 0 : index
    %c0_6 = arith.constant 0 : index
    %c0_7 = arith.constant 0 : index
    %6 = vector.load %arg11[%c0_5, %c0_6, %c0_7] : memref<2x32x256xf32, #tpu.memory_space<vmem>>, vector<1x32x256xf32>
    %7 = vector.shape_cast %6 : vector<1x32x256xf32> to vector<32x256xf32>
    %8 = vector.shape_cast %5 : vector<32x256xf32> to vector<1x32x256xf32>
    tpu.vector_store %arg11[%c0_5, %c0_6, %c0_7], %8 {strides = array<i32>} : memref<2x32x256xf32, #tpu.memory_space<vmem>>, vector<1x32x256xf32>,
    %cst_8 = arith.constant dense<0.000000e+00> : vector<32xf32>
    %9 = vector.multi_reduction <add>, %5, %cst_8 [1] : vector<32x256xf32> to vector<32xf32>
    %10 = vector.shape_cast %9 : vector<32xf32> to vector<32x1xf32>
    %11 = arith.addf %0, %10 : vector<32x1xf32>
    %c0_9 = arith.constant 0 : index
    %c0_10 = arith.constant 0 : index
    %12 = vector.load %arg2[%c0_9, %c0_10] : memref<32x4xbf16, #tpu.memory_space<vmem>>, vector<32x4xbf16>
    %c1 = arith.constant 1 : index
    %c0_11 = arith.constant 0 : index
    %c0_12 = arith.constant 0 : index
    %13 = vector.load %arg1[%c1, %c0_11, %c0_12] : memref<2x4x256xf32, #tpu.memory_space<vmem>>, vector<1x4x256xf32>
    %14 = vector.shape_cast %13 : vector<1x4x256xf32> to vector<4x256xf32>
    %15 = arith.truncf %14 : vector<4x256xf32> to vector<4x256xbf16>
    %cst_13 = arith.constant dense<0.000000e+00> : vector<32x256xf32>
    %16 = tpu.matmul %12, %15, %cst_13 {dimension_numbers = #tpu.dot_dimension_numbers<[1], [0], [0], [1], [0, 0, 1, 1], [], []>} : vector<32x4xbf16>, vector<4x256xbf16>, vector<32x256xf32> -> vector<32x256xf32>
    %c1_14 = arith.constant 1 : index
    %c0_15 = arith.constant 0 : index
    %c0_16 = arith.constant 0 : index
    %17 = vector.load %arg11[%c1_14, %c0_15, %c0_16] : memref<2x32x256xf32, #tpu.memory_space<vmem>>, vector<1x32x256xf32>
    %18 = vector.shape_cast %17 : vector<1x32x256xf32> to vector<32x256xf32>
    %19 = vector.shape_cast %16 : vector<32x256xf32> to vector<1x32x256xf32>
    tpu.vector_store %arg11[%c1_14, %c0_15, %c0_16], %19 {strides = array<i32>} : memref<2x32x256xf32, #tpu.memory_space<vmem>>, vector<1x32x256xf32>,
    %cst_17 = arith.constant dense<0.000000e+00> : vector<32xf32>
    %20 = vector.multi_reduction <add>, %16, %cst_17 [1] : vector<32x256xf32> to vector<32xf32>
    %21 = vector.shape_cast %20 : vector<32xf32> to vector<32x1xf32>
    %22 = arith.addf %11, %21 : vector<32x1xf32>
    %cst_18 = arith.constant 0.001953125 : f32
    %23 = vector.broadcast %cst_18 : f32 to vector<32x1xf32>
    %24 = arith.mulf %22, %23 : vector<32x1xf32>
    %cst_19 = arith.constant 0.000000e+00 : f32
    %25 = vector.broadcast %cst_19 : f32 to vector<32x1xf32>
    %c0_20 = arith.constant 0 : index
    %c0_21 = arith.constant 0 : index
    %c0_22 = arith.constant 0 : index
    %26 = vector.load %arg11[%c0_20, %c0_21, %c0_22] : memref<2x32x256xf32, #tpu.memory_space<vmem>>, vector<1x32x256xf32>
    %27 = vector.shape_cast %26 : vector<1x32x256xf32> to vector<32x256xf32>
    %28 = vector.broadcast %24 : vector<32x1xf32> to vector<32x256xf32>
    %29 = arith.subf %27, %28 : vector<32x256xf32>
    %30 = arith.mulf %29, %29 : vector<32x256xf32>
    %cst_23 = arith.constant dense<0.000000e+00> : vector<32xf32>
    %31 = vector.multi_reduction <add>, %30, %cst_23 [1] : vector<32x256xf32> to vector<32xf32>
    %32 = vector.shape_cast %31 : vector<32xf32> to vector<32x1xf32>
    %33 = arith.addf %25, %32 : vector<32x1xf32>
    %c1_24 = arith.constant 1 : index
    %c0_25 = arith.constant 0 : index
    %c0_26 = arith.constant 0 : index
    %34 = vector.load %arg11[%c1_24, %c0_25, %c0_26] : memref<2x32x256xf32, #tpu.memory_space<vmem>>, vector<1x32x256xf32>
    %35 = vector.shape_cast %34 : vector<1x32x256xf32> to vector<32x256xf32>
    %36 = vector.broadcast %24 : vector<32x1xf32> to vector<32x256xf32>
    %37 = arith.subf %35, %36 : vector<32x256xf32>
    %38 = arith.mulf %37, %37 : vector<32x256xf32>
    %cst_27 = arith.constant dense<0.000000e+00> : vector<32xf32>
    %39 = vector.multi_reduction <add>, %38, %cst_27 [1] : vector<32x256xf32> to vector<32xf32>
    %40 = vector.shape_cast %39 : vector<32xf32> to vector<32x1xf32>
    %41 = arith.addf %33, %40 : vector<32x1xf32>
    %c0_28 = arith.constant 0 : index
    %c0_29 = arith.constant 0 : index
    %42 = vector.load %arg5[%c0_28, %c0_29] : memref<32x1xf32, #tpu.memory_space<vmem>>, vector<32x1xf32>
    %cst_30 = arith.constant 0.001953125 : f32
    %43 = vector.broadcast %cst_30 : f32 to vector<32x1xf32>
    %44 = arith.mulf %41, %43 : vector<32x1xf32>
    %cst_31 = arith.constant 9.99999974E-6 : f32
    %45 = vector.broadcast %cst_31 : f32 to vector<32x1xf32>
    %46 = arith.addf %44, %45 : vector<32x1xf32>
    %47 = math.rsqrt %46 : vector<32x1xf32>
    %48 = arith.mulf %42, %47 : vector<32x1xf32>
    %c0_32 = arith.constant 0 : index
    %c0_33 = arith.constant 0 : index
    %49 = vector.load %arg6[%c0_32, %c0_33] : memref<32x1xf32, #tpu.memory_space<vmem>>, vector<32x1xf32>
    %50 = arith.mulf %24, %48 : vector<32x1xf32>
    %51 = arith.subf %49, %50 : vector<32x1xf32>
    %cst_34 = arith.constant 0.000000e+00 : f32
    %52 = vector.broadcast %cst_34 : f32 to vector<32x1xf32>
    %c0_35 = arith.constant 0 : index
    %c0_36 = arith.constant 0 : index
    %c0_37 = arith.constant 0 : index
    %53 = vector.load %arg11[%c0_35, %c0_36, %c0_37] : memref<2x32x256xf32, #tpu.memory_space<vmem>>, vector<1x32x256xf32>
    %54 = vector.shape_cast %53 : vector<1x32x256xf32> to vector<32x256xf32>
    %55 = vector.broadcast %48 : vector<32x1xf32> to vector<32x256xf32>
    %56 = arith.mulf %54, %55 : vector<32x256xf32>
    %57 = vector.broadcast %51 : vector<32x1xf32> to vector<32x256xf32>
    %58 = arith.addf %56, %57 : vector<32x256xf32>
    %cst_38 = arith.constant 0.000000e+00 : f32
    %59 = vector.broadcast %cst_38 : f32 to vector<32x256xf32>
    %60 = arith.maximumf %58, %59 : vector<32x256xf32>
    %61 = arith.truncf %60 : vector<32x256xf32> to vector<32x256xbf16>
    %c0_39 = arith.constant 0 : index
    %c0_40 = arith.constant 0 : index
    %62 = vector.load %arg3[%c0_39, %c0_40] : memref<32x32xbf16, #tpu.memory_space<vmem>>, vector<32x32xbf16>
    %cst_41 = arith.constant dense<0.000000e+00> : vector<32x256xf32>
    %63 = tpu.matmul %62, %61, %cst_41 {dimension_numbers = #tpu.dot_dimension_numbers<[1], [0], [0], [1], [0, 0, 1, 1], [], []>} : vector<32x32xbf16>, vector<32x256xbf16>, vector<32x256xf32> -> vector<32x256xf32>
    %c0_42 = arith.constant 0 : index
    %c0_43 = arith.constant 0 : index
    %c0_44 = arith.constant 0 : index
    %64 = vector.load %arg12[%c0_42, %c0_43, %c0_44] : memref<2x32x256xf32, #tpu.memory_space<vmem>>, vector<1x32x256xf32>
    %65 = vector.shape_cast %64 : vector<1x32x256xf32> to vector<32x256xf32>
    %66 = vector.shape_cast %63 : vector<32x256xf32> to vector<1x32x256xf32>
    tpu.vector_store %arg12[%c0_42, %c0_43, %c0_44], %66 {strides = array<i32>} : memref<2x32x256xf32, #tpu.memory_space<vmem>>, vector<1x32x256xf32>,
    %cst_45 = arith.constant dense<0.000000e+00> : vector<32xf32>
    %67 = vector.multi_reduction <add>, %63, %cst_45 [1] : vector<32x256xf32> to vector<32xf32>
    %68 = vector.shape_cast %67 : vector<32xf32> to vector<32x1xf32>
    %69 = arith.addf %52, %68 : vector<32x1xf32>
    %c1_46 = arith.constant 1 : index
    %c0_47 = arith.constant 0 : index
    %c0_48 = arith.constant 0 : index
    %70 = vector.load %arg11[%c1_46, %c0_47, %c0_48] : memref<2x32x256xf32, #tpu.memory_space<vmem>>, vector<1x32x256xf32>
    %71 = vector.shape_cast %70 : vector<1x32x256xf32> to vector<32x256xf32>
    %72 = vector.broadcast %48 : vector<32x1xf32> to vector<32x256xf32>
    %73 = arith.mulf %71, %72 : vector<32x256xf32>
    %74 = vector.broadcast %51 : vector<32x1xf32> to vector<32x256xf32>
    %75 = arith.addf %73, %74 : vector<32x256xf32>
    %cst_49 = arith.constant 0.000000e+00 : f32
    %76 = vector.broadcast %cst_49 : f32 to vector<32x256xf32>
    %77 = arith.maximumf %75, %76 : vector<32x256xf32>
    %78 = arith.truncf %77 : vector<32x256xf32> to vector<32x256xbf16>
    %c0_50 = arith.constant 0 : index
    %c0_51 = arith.constant 0 : index
    %79 = vector.load %arg3[%c0_50, %c0_51] : memref<32x32xbf16, #tpu.memory_space<vmem>>, vector<32x32xbf16>
    %cst_52 = arith.constant dense<0.000000e+00> : vector<32x256xf32>
    %80 = tpu.matmul %79, %78, %cst_52 {dimension_numbers = #tpu.dot_dimension_numbers<[1], [0], [0], [1], [0, 0, 1, 1], [], []>} : vector<32x32xbf16>, vector<32x256xbf16>, vector<32x256xf32> -> vector<32x256xf32>
    %c1_53 = arith.constant 1 : index
    %c0_54 = arith.constant 0 : index
    %c0_55 = arith.constant 0 : index
    %81 = vector.load %arg12[%c1_53, %c0_54, %c0_55] : memref<2x32x256xf32, #tpu.memory_space<vmem>>, vector<1x32x256xf32>
    %82 = vector.shape_cast %81 : vector<1x32x256xf32> to vector<32x256xf32>
    %83 = vector.shape_cast %80 : vector<32x256xf32> to vector<1x32x256xf32>
    tpu.vector_store %arg12[%c1_53, %c0_54, %c0_55], %83 {strides = array<i32>} : memref<2x32x256xf32, #tpu.memory_space<vmem>>, vector<1x32x256xf32>,
    %cst_56 = arith.constant dense<0.000000e+00> : vector<32xf32>
    %84 = vector.multi_reduction <add>, %80, %cst_56 [1] : vector<32x256xf32> to vector<32xf32>
    %85 = vector.shape_cast %84 : vector<32xf32> to vector<32x1xf32>
    %86 = arith.addf %69, %85 : vector<32x1xf32>
    %cst_57 = arith.constant 0.001953125 : f32
    %87 = vector.broadcast %cst_57 : f32 to vector<32x1xf32>
    %88 = arith.mulf %86, %87 : vector<32x1xf32>
    %cst_58 = arith.constant 0.000000e+00 : f32
    %89 = vector.broadcast %cst_58 : f32 to vector<32x1xf32>
    %c0_59 = arith.constant 0 : index
    %c0_60 = arith.constant 0 : index
    %c0_61 = arith.constant 0 : index
    %90 = vector.load %arg12[%c0_59, %c0_60, %c0_61] : memref<2x32x256xf32, #tpu.memory_space<vmem>>, vector<1x32x256xf32>
    %91 = vector.shape_cast %90 : vector<1x32x256xf32> to vector<32x256xf32>
    %92 = vector.broadcast %88 : vector<32x1xf32> to vector<32x256xf32>
    %93 = arith.subf %91, %92 : vector<32x256xf32>
    %94 = arith.mulf %93, %93 : vector<32x256xf32>
    %cst_62 = arith.constant dense<0.000000e+00> : vector<32xf32>
    %95 = vector.multi_reduction <add>, %94, %cst_62 [1] : vector<32x256xf32> to vector<32xf32>
    %96 = vector.shape_cast %95 : vector<32xf32> to vector<32x1xf32>
    %97 = arith.addf %89, %96 : vector<32x1xf32>
    %c1_63 = arith.constant 1 : index
    %c0_64 = arith.constant 0 : index
    %c0_65 = arith.constant 0 : index
    %98 = vector.load %arg12[%c1_63, %c0_64, %c0_65] : memref<2x32x256xf32, #tpu.memory_space<vmem>>, vector<1x32x256xf32>
    %99 = vector.shape_cast %98 : vector<1x32x256xf32> to vector<32x256xf32>
    %100 = vector.broadcast %88 : vector<32x1xf32> to vector<32x256xf32>
    %101 = arith.subf %99, %100 : vector<32x256xf32>
    %102 = arith.mulf %101, %101 : vector<32x256xf32>
    %cst_66 = arith.constant dense<0.000000e+00> : vector<32xf32>
    %103 = vector.multi_reduction <add>, %102, %cst_66 [1] : vector<32x256xf32> to vector<32xf32>
    %104 = vector.shape_cast %103 : vector<32xf32> to vector<32x1xf32>
    %105 = arith.addf %97, %104 : vector<32x1xf32>
    %c0_67 = arith.constant 0 : index
    %c0_68 = arith.constant 0 : index
    %106 = vector.load %arg7[%c0_67, %c0_68] : memref<32x1xf32, #tpu.memory_space<vmem>>, vector<32x1xf32>
    %cst_69 = arith.constant 0.001953125 : f32
    %107 = vector.broadcast %cst_69 : f32 to vector<32x1xf32>
    %108 = arith.mulf %105, %107 : vector<32x1xf32>
    %cst_70 = arith.constant 9.99999974E-6 : f32
    %109 = vector.broadcast %cst_70 : f32 to vector<32x1xf32>
    %110 = arith.addf %108, %109 : vector<32x1xf32>
    %111 = math.rsqrt %110 : vector<32x1xf32>
    %112 = arith.mulf %106, %111 : vector<32x1xf32>
    %c0_71 = arith.constant 0 : index
    %c0_72 = arith.constant 0 : index
    %113 = vector.load %arg8[%c0_71, %c0_72] : memref<32x1xf32, #tpu.memory_space<vmem>>, vector<32x1xf32>
    %114 = arith.mulf %88, %112 : vector<32x1xf32>
    %115 = arith.subf %113, %114 : vector<32x1xf32>
    %c0_73 = arith.constant 0 : index
    %c0_74 = arith.constant 0 : index
    %c0_75 = arith.constant 0 : index
    %116 = vector.load %arg12[%c0_73, %c0_74, %c0_75] : memref<2x32x256xf32, #tpu.memory_space<vmem>>, vector<1x32x256xf32>
    %117 = vector.shape_cast %116 : vector<1x32x256xf32> to vector<32x256xf32>
    %118 = vector.broadcast %112 : vector<32x1xf32> to vector<32x256xf32>
    %119 = arith.mulf %117, %118 : vector<32x256xf32>
    %120 = vector.broadcast %115 : vector<32x1xf32> to vector<32x256xf32>
    %121 = arith.addf %119, %120 : vector<32x256xf32>
    %cst_76 = arith.constant 0.000000e+00 : f32
    %122 = vector.broadcast %cst_76 : f32 to vector<32x256xf32>
    %123 = arith.maximumf %121, %122 : vector<32x256xf32>
    %124 = arith.truncf %123 : vector<32x256xf32> to vector<32x256xbf16>
    %c0_77 = arith.constant 0 : index
    %c0_78 = arith.constant 0 : index
    %125 = vector.load %arg4[%c0_77, %c0_78] : memref<8x32xbf16, #tpu.memory_space<vmem>>, vector<8x32xbf16>
    %cst_79 = arith.constant dense<0.000000e+00> : vector<8x256xf32>
    %126 = tpu.matmul %125, %124, %cst_79 {dimension_numbers = #tpu.dot_dimension_numbers<[1], [0], [0], [1], [0, 0, 1, 1], [], []>} : vector<8x32xbf16>, vector<32x256xbf16>, vector<8x256xf32> -> vector<8x256xf32>
    %c0_80 = arith.constant 0 : index
    %c0_81 = arith.constant 0 : index
    %127 = vector.load %arg9[%c0_80, %c0_81] : memref<8x1xf32, #tpu.memory_space<vmem>>, vector<8x1xf32>
    %128 = vector.broadcast %127 : vector<8x1xf32> to vector<8x256xf32>
    %129 = arith.addf %126, %128 : vector<8x256xf32>
    %c0_82 = arith.constant 0 : index
    %c0_83 = arith.constant 0 : index
    %c0_84 = arith.constant 0 : index
    %130 = vector.load %arg10[%c0_82, %c0_83, %c0_84] : memref<2x8x256xf32, #tpu.memory_space<vmem>>, vector<1x8x256xf32>
    %131 = vector.shape_cast %130 : vector<1x8x256xf32> to vector<8x256xf32>
    %132 = vector.shape_cast %129 : vector<8x256xf32> to vector<1x8x256xf32>
    tpu.vector_store %arg10[%c0_82, %c0_83, %c0_84], %132 {strides = array<i32>} : memref<2x8x256xf32, #tpu.memory_space<vmem>>, vector<1x8x256xf32>,
    %c1_85 = arith.constant 1 : index
    %c0_86 = arith.constant 0 : index
    %c0_87 = arith.constant 0 : index
    %133 = vector.load %arg12[%c1_85, %c0_86, %c0_87] : memref<2x32x256xf32, #tpu.memory_space<vmem>>, vector<1x32x256xf32>
    %134 = vector.shape_cast %133 : vector<1x32x256xf32> to vector<32x256xf32>
    %135 = vector.broadcast %112 : vector<32x1xf32> to vector<32x256xf32>
    %136 = arith.mulf %134, %135 : vector<32x256xf32>
    %137 = vector.broadcast %115 : vector<32x1xf32> to vector<32x256xf32>
    %138 = arith.addf %136, %137 : vector<32x256xf32>
    %cst_88 = arith.constant 0.000000e+00 : f32
    %139 = vector.broadcast %cst_88 : f32 to vector<32x256xf32>
    %140 = arith.maximumf %138, %139 : vector<32x256xf32>
    %141 = arith.truncf %140 : vector<32x256xf32> to vector<32x256xbf16>
    %c0_89 = arith.constant 0 : index
    %c0_90 = arith.constant 0 : index
    %142 = vector.load %arg4[%c0_89, %c0_90] : memref<8x32xbf16, #tpu.memory_space<vmem>>, vector<8x32xbf16>
    %cst_91 = arith.constant dense<0.000000e+00> : vector<8x256xf32>
    %143 = tpu.matmul %142, %141, %cst_91 {dimension_numbers = #tpu.dot_dimension_numbers<[1], [0], [0], [1], [0, 0, 1, 1], [], []>} : vector<8x32xbf16>, vector<32x256xbf16>, vector<8x256xf32> -> vector<8x256xf32>
    %c0_92 = arith.constant 0 : index
    %c0_93 = arith.constant 0 : index
    %144 = vector.load %arg9[%c0_92, %c0_93] : memref<8x1xf32, #tpu.memory_space<vmem>>, vector<8x1xf32>
    %145 = vector.broadcast %144 : vector<8x1xf32> to vector<8x256xf32>
    %146 = arith.addf %143, %145 : vector<8x256xf32>
    %c1_94 = arith.constant 1 : index
    %c0_95 = arith.constant 0 : index
    %c0_96 = arith.constant 0 : index
    %147 = vector.load %arg10[%c1_94, %c0_95, %c0_96] : memref<2x8x256xf32, #tpu.memory_space<vmem>>, vector<1x8x256xf32>
    %148 = vector.shape_cast %147 : vector<1x8x256xf32> to vector<8x256xf32>
    %149 = vector.shape_cast %146 : vector<8x256xf32> to vector<1x8x256xf32>
    tpu.vector_store %arg10[%c1_94, %c0_95, %c0_96], %149 {strides = array<i32>} : memref<2x8x256xf32, #tpu.memory_space<vmem>>, vector<1x8x256xf32>,
    return
  }
  func.func @transform_0(%arg0: i32) -> (i32, i32, i32) {
    %c0_i32 = arith.constant 0 : i32
    %c0_i32_0 = arith.constant 0 : i32
    %c0_i32_1 = arith.constant 0 : i32
    %c0_i32_2 = arith.constant 0 : i32
    return %c0_i32, %c0_i32_0, %c0_i32_1 : i32, i32, i32
  }
  func.func @transform_1(%arg0: i32) -> (i32, i32) {
    %c0_i32 = arith.constant 0 : i32
    %c0_i32_0 = arith.constant 0 : i32
    %c0_i32_1 = arith.constant 0 : i32
    return %c0_i32, %c0_i32_0 : i32, i32
  }
  func.func @transform_2(%arg0: i32) -> (i32, i32) {
    %c0_i32 = arith.constant 0 : i32
    %c0_i32_0 = arith.constant 0 : i32
    %c0_i32_1 = arith.constant 0 : i32
    return %c0_i32, %c0_i32_0 : i32, i32
  }
  func.func @transform_3(%arg0: i32) -> (i32, i32) {
    %c0_i32 = arith.constant 0 : i32
    %c0_i32_0 = arith.constant 0 : i32
    %c0_i32_1 = arith.constant 0 : i32
    return %c0_i32, %c0_i32_0 : i32, i32
  }
  func.func @transform_4(%arg0: i32) -> (i32, i32) {
    %c0_i32 = arith.constant 0 : i32
    %c0_i32_0 = arith.constant 0 : i32
    %c0_i32_1 = arith.constant 0 : i32
    return %c0_i32, %c0_i32_0 : i32, i32
  }
  func.func @transform_5(%arg0: i32) -> (i32, i32) {
    %c0_i32 = arith.constant 0 : i32
    %c0_i32_0 = arith.constant 0 : i32
    %c0_i32_1 = arith.constant 0 : i32
    return %c0_i32, %c0_i32_0 : i32, i32
  }
  func.func @transform_6(%arg0: i32) -> (i32, i32) {
    %c0_i32 = arith.constant 0 : i32
    %c0_i32_0 = arith.constant 0 : i32
    %c0_i32_1 = arith.constant 0 : i32
    return %c0_i32, %c0_i32_0 : i32, i32
  }
  func.func @transform_7(%arg0: i32) -> (i32, i32) {
    %c0_i32 = arith.constant 0 : i32
    %c0_i32_0 = arith.constant 0 : i32
    %c0_i32_1 = arith.constant 0 : i32
    return %c0_i32, %c0_i32_0 : i32, i32
  }
  func.func @transform_8(%arg0: i32) -> (i32, i32) {
    %c0_i32 = arith.constant 0 : i32
    %c0_i32_0 = arith.constant 0 : i32
    %c0_i32_1 = arith.constant 0 : i32
    return %c0_i32, %c0_i32_0 : i32, i32
  }
  func.func @transform_9(%arg0: i32) -> (i32, i32, i32) {
    %c0_i32 = arith.constant 0 : i32
    %c0_i32_0 = arith.constant 0 : i32
    %c0_i32_1 = arith.constant 0 : i32
    %c0_i32_2 = arith.constant 0 : i32
    return %c0_i32, %c0_i32_0, %c0_i32_1 : i32, i32, i32
  }
}

</mosaic_0001>

<llo_original>
// kernel: tpu_custom_call.1
$region0: #{tpu_custom_call.1}
  #allocation0 [shape = 'u32[]', space=smem, size = 0x4, offset = 0x4, fixed_abs, tag = 'smem constant byte address 0x4 - core index']
  #allocation1 [shape = 'u32[144,128]{1,0:T(1,128)}', space=vmem, size = 0x12000, scoped, tag = 'internal scratch']
  #allocation2 [shape = 'f32[2,32,256]{2,1,0:T(8,128)}', space=vmem, size = 0x10000, scoped, tag = 'scratch operand']
  #allocation3 [shape = 'f32[2,32,256]{2,1,0:T(8,128)}', space=vmem, size = 0x10000, scoped, tag = 'scratch operand']
  %s0 = inlined_call_operand.vmem [shape: f32[2,4,256], index: 0, kind: input, shape index: {}]
  %s1 = inlined_call_operand.vmem [shape: bf16[32,4], index: 1, kind: input, shape index: {}]
  %s2 = inlined_call_operand.vmem [shape: bf16[32,32], index: 2, kind: input, shape index: {}]
  %s3 = inlined_call_operand.vmem [shape: bf16[8,32], index: 3, kind: input, shape index: {}]
  %s4 = inlined_call_operand.vmem [shape: f32[32,1], index: 4, kind: input, shape index: {}]
  %s5 = inlined_call_operand.vmem [shape: f32[32,1], index: 5, kind: input, shape index: {}]
  %s6 = inlined_call_operand.vmem [shape: f32[32,1], index: 6, kind: input, shape index: {}]
  %s7 = inlined_call_operand.vmem [shape: f32[32,1], index: 7, kind: input, shape index: {}]
  %s8 = inlined_call_operand.vmem [shape: f32[8,1], index: 8, kind: input, shape index: {}]
  %s9 = inlined_call_operand.hbm [shape: f32[2,8,256], index: 9, kind: output, shape index: {}]
  %s10 = sld [smem:[#allocation0]]
  $region46: #{tpu_custom_call.1} parent=0
    _
  %s12 = ssub.s32 1, %s10
  %s13 = scalar_select 0, %s12, %s10
  $region1: #{tpu_custom_call.1} parent=0
    #allocation4 [shape = 'u8[16384]{0}', space=vmem, size = 0x4000, scoped, tag = 'output window, operand 0, single buffered']
    #allocation5 [shape = 's32[1]{0}', space=sflag, size = 0x4, scoped, tag = 'scoped memory for tpu_custom_call.1']
    %14 = vsyncpa [#allocation5], 0
    // Predicated region
    $region2: #{tpu_custom_call.1} parent=1 // pred_check
      _
    $region3: #{tpu_custom_call.1} parent=1 // pred_check_branch
      %16 = sbr.rel (0) target = $region5
    $region4: #{tpu_custom_call.1} parent=1 // pred_region
      _
    $region5: #{tpu_custom_call.1} parent=1 // pred_fallthru
      _
    // Predicated region
    $region6: #{tpu_custom_call.1} parent=1 // pred_check
      _
    $region7: #{tpu_custom_call.1} parent=1 // pred_check_branch
      %18 = sbr.rel (0) target = $region9
    $region8: #{tpu_custom_call.1} parent=1 // pred_region
      _
    $region9: #{tpu_custom_call.1} parent=1 // pred_fallthru
      _
    // Predicated region
    $region10: #{tpu_custom_call.1} parent=1 // pred_check
      _
    $region11: #{tpu_custom_call.1} parent=1 // pred_check_branch
      %20 = sbr.rel (0) target = $region13
    $region12: #{tpu_custom_call.1} parent=1 // pred_region
      _
    $region13: #{tpu_custom_call.1} parent=1 // pred_fallthru
      _
    // Predicated region
    $region14: #{tpu_custom_call.1} parent=1 // pred_check
      _
    $region15: #{tpu_custom_call.1} parent=1 // pred_check_branch
      %22 = sbr.rel (0) target = $region17
    $region16: #{tpu_custom_call.1} parent=1 // pred_region
      _
    $region17: #{tpu_custom_call.1} parent=1 // pred_fallthru
      _
    // Predicated region
    $region18: #{tpu_custom_call.1} parent=1 // pred_check
      _
    $region19: #{tpu_custom_call.1} parent=1 // pred_check_branch
      %24 = sbr.rel (0) target = $region21
    $region20: #{tpu_custom_call.1} parent=1 // pred_region
      _
    $region21: #{tpu_custom_call.1} parent=1 // pred_fallthru
      _
    // Predicated region
    $region22: #{tpu_custom_call.1} parent=1 // pred_check
      _
    $region23: #{tpu_custom_call.1} parent=1 // pred_check_branch
      %26 = sbr.rel (0) target = $region25
    $region24: #{tpu_custom_call.1} parent=1 // pred_region
      _
    $region25: #{tpu_custom_call.1} parent=1 // pred_fallthru
      _
    // Predicated region
    $region26: #{tpu_custom_call.1} parent=1 // pred_check
      _
    $region27: #{tpu_custom_call.1} parent=1 // pred_check_branch
      %28 = sbr.rel (0) target = $region29
    $region28: #{tpu_custom_call.1} parent=1 // pred_region
      _
    $region29: #{tpu_custom_call.1} parent=1 // pred_fallthru
      _
    // Predicated region
    $region30: #{tpu_custom_call.1} parent=1 // pred_check
      _
    $region31: #{tpu_custom_call.1} parent=1 // pred_check_branch
      %30 = sbr.rel (0) target = $region33
    $region32: #{tpu_custom_call.1} parent=1 // pred_region
      _
    $region33: #{tpu_custom_call.1} parent=1 // pred_fallthru
      _
    // Predicated region
    $region34: #{tpu_custom_call.1} parent=1 // pred_check
      _
    $region35: #{tpu_custom_call.1} parent=1 // pred_check_branch
      %32 = sbr.rel (0) target = $region37
    $region36: #{tpu_custom_call.1} parent=1 // pred_region
      _
    $region37: #{tpu_custom_call.1} parent=1 // pred_fallthru
      _
    %v34 = vld [vmem:[%s1] sm:$0xf]
    %v35 = vld [vmem:[%s1 + $0x4] sm:$0xf]
    %v36 = vld [vmem:[%s1 + $0x8] sm:$0xf]
    %v37 = vld [vmem:[%s1 + $0xc] sm:$0xf]
    %v38 = vld [vmem:[%s0] sm:$0xff]
    %v40 = vcombine.high %v38, %v38
    %v42 = vpack.c.bf16 %v38, %v38
    %v43 = vpack.c.bf16 %v40, %v40
    %v48 = vunpack.c.l.b16 %v34
    %v49 = vunpack.c.l.b16 %v35
    %v50 = vunpack.c.l.b16 %v36
    %v51 = vunpack.c.l.b16 %v37
    %v52 = vpack.c.b16 %v49, %v48
    %v53 = vpack.c.b16 %v51, %v50
    %vm54 = vcmask 31744
    %v56 = vsel %vm54, %v52, 0
    %v59 = vsel %vm54, %v53, 0
    %vm61 = vcmask 1041408
    %v63 = vsel %vm61, %v42, 0
    %v66 = vsel %vm61, %v43, 0
    %68 = vmatprep.subr.bf16.mxu0 %v66
    %69 = vmatpush1.bf16.msra.mxu0 %v63
    %70 = vmatprep.subr.bf16.mxu0 0
    %71 = vmatpush1.bf16.msra.mxu0 0
    %72 = vmatprep.subr.bf16.mxu0 0
    %73 = vmatpush1.bf16.msra.mxu0 0
    %74 = vmatprep.subr.bf16.mxu0 0
    %75 = vmatpush1.bf16.msra.mxu0 0
    %76 = vmatprep.subr.bf16.mxu0 0
    %77 = vmatpush1.bf16.msra.mxu0 0
    %78 = vmatprep.subr.bf16.mxu0 0
    %79 = vmatpush1.bf16.msra.mxu0 0
    %80 = vmatprep.subr.bf16.mxu0 0
    %81 = vmatpush1.bf16.msra.mxu0 0
    %82 = vmatprep.subr.bf16.mxu0 0
    %83 = vmatpush1.bf16.msra.mxu0 0
    %84 = vmatprep.subr.bf16.mxu0 0
    %85 = vmatpush1.bf16.msra.mxu0 0
    %86 = vmatprep.subr.bf16.mxu0 0
    %87 = vmatpush1.bf16.msra.mxu0 0
    %88 = vmatprep.subr.bf16.mxu0 0
    %89 = vmatpush1.bf16.msra.mxu0 0
    %90 = vmatprep.subr.bf16.mxu0 0
    %91 = vmatpush1.bf16.msra.mxu0 0
    %92 = vmatprep.subr.bf16.mxu0 0
    %93 = vmatpush1.bf16.msra.mxu0 0
    %94 = vmatprep.subr.bf16.mxu0 0
    %95 = vmatpush1.bf16.msra.mxu0 0
    %96 = vmatprep.subr.bf16.mxu0 0
    %97 = vmatpush1.bf16.msra.mxu0 0
    %98 = vmatprep.subr.bf16.mxu0 0
    %99 = vmatpush1.bf16.msra.mxu0 0
    %100 = vmatprep.mubr.bf16.mxu0 0
    %101 = vmatmul.mubr.bf16.gmra.mrb[0].mxu0 %v56
    %v102 = vpop.f32.mrb[0].mxu0
    %v103 = vadd.f32 0.0, %v102
    %v104 = vpop.f32.mrb[0].mxu0
    %v105 = vadd.f32 0.0, %v104
    %v106 = vpop.f32.mrb[0].mxu0
    %v107 = vadd.f32 0.0, %v106
    %v108 = vpop.f32.mrb[0].mxu0
    %v109 = vadd.f32 0.0, %v108
    %110 = vmatprep.mubr.bf16.mxu0 0
    %111 = vmatmul.mubr.bf16.gmra.mrb[0].mxu0 %v59
    %v112 = vpop.f32.mrb[0].mxu0
    %v113 = vadd.f32 0.0, %v112
    %v114 = vpop.f32.mrb[0].mxu0
    %v115 = vadd.f32 0.0, %v114
    %v116 = vpop.f32.mrb[0].mxu0
    %v117 = vadd.f32 0.0, %v116
    %v118 = vpop.f32.mrb[0].mxu0
    %v119 = vadd.f32 0.0, %v118
    %120 = vdwg.mxu0
    %121 = vst [vmem:[#allocation2] sm:$0xff] %v103
    %122 = vst [vmem:[#allocation2 + $0x8] sm:$0xff] %v105
    %123 = vst [vmem:[#allocation2 + $0x10] sm:$0xff] %v107
    %124 = vst [vmem:[#allocation2 + $0x18] sm:$0xff] %v109
    %125 = vst [vmem:[#allocation2 + $0x20] sm:$0xff] %v113
    %126 = vst [vmem:[#allocation2 + $0x28] sm:$0xff] %v115
    %127 = vst [vmem:[#allocation2 + $0x30] sm:$0xff] %v117
    %128 = vst [vmem:[#allocation2 + $0x38] sm:$0xff] %v119
    %v129 = vadd.f32 %v103, %v105
    %130 = vadd.xlane.f32.xlu0 %v129
    %v131 = vpop.xlane.xlu0 %130
    %v132 = vadd.f32 %v107, %v109
    %133 = vadd.xlane.f32.xlu0 %v132
    %v134 = vpop.xlane.xlu0 %133
    %v135 = vadd.f32 %v113, %v115
    %136 = vadd.xlane.f32.xlu0 %v135
    %v137 = vpop.xlane.xlu0 %136
    %v138 = vadd.f32 %v117, %v119
    %139 = vadd.xlane.f32.xlu0 %v138
    %v140 = vpop.xlane.xlu0 %139
    %v141 = vadd.f32 %v131, 0.0
    %v142 = vadd.f32 %v134, 0.0
    %v143 = vadd.f32 %v137, 0.0
    %v144 = vadd.f32 %v140, 0.0
    %v145 = vld [vmem:[%s1] sm:$0xf]
    %v146 = vld [vmem:[%s1 + $0x4] sm:$0xf]
    %v147 = vld [vmem:[%s1 + $0x8] sm:$0xf]
    %v148 = vld [vmem:[%s1 + $0xc] sm:$0xf]
    %s149 = scalar_lea.vmem %s0, 8
    %v150 = vld [vmem:[%s149] sm:$0xff]
    %v152 = vcombine.high %v150, %v150
    %v154 = vpack.c.bf16 %v150, %v150
    %v155 = vpack.c.bf16 %v152, %v152
    %v160 = vunpack.c.l.b16 %v145
    %v161 = vunpack.c.l.b16 %v146
    %v162 = vunpack.c.l.b16 %v147
    %v163 = vunpack.c.l.b16 %v148
    %v164 = vpack.c.b16 %v161, %v160
    %v165 = vpack.c.b16 %v163, %v162
    %v167 = vsel %vm54, %v164, 0
    %v170 = vsel %vm54, %v165, 0
    %v173 = vsel %vm61, %v154, 0
    %v176 = vsel %vm61, %v155, 0
    %178 = vmatprep.subr.bf16.mxu0 %v176
    %179 = vmatpush1.bf16.msra.mxu0 %v173
    %180 = vmatprep.subr.bf16.mxu0 0
    %181 = vmatpush1.bf16.msra.mxu0 0
    %182 = vmatprep.subr.bf16.mxu0 0
    %183 = vmatpush1.bf16.msra.mxu0 0
    %184 = vmatprep.subr.bf16.mxu0 0
    %185 = vmatpush1.bf16.msra.mxu0 0
    %186 = vmatprep.subr.bf16.mxu0 0
    %187 = vmatpush1.bf16.msra.mxu0 0
    %188 = vmatprep.subr.bf16.mxu0 0
    %189 = vmatpush1.bf16.msra.mxu0 0
    %190 = vmatprep.subr.bf16.mxu0 0
    %191 = vmatpush1.bf16.msra.mxu0 0
    %192 = vmatprep.subr.bf16.mxu0 0
    %193 = vmatpush1.bf16.msra.mxu0 0
    %194 = vmatprep.subr.bf16.mxu0 0
    %195 = vmatpush1.bf16.msra.mxu0 0
    %196 = vmatprep.subr.bf16.mxu0 0
    %197 = vmatpush1.bf16.msra.mxu0 0
    %198 = vmatprep.subr.bf16.mxu0 0
    %199 = vmatpush1.bf16.msra.mxu0 0
    %200 = vmatprep.subr.bf16.mxu0 0
    %201 = vmatpush1.bf16.msra.mxu0 0
    %202 = vmatprep.subr.bf16.mxu0 0
    %203 = vmatpush1.bf16.msra.mxu0 0
    %204 = vmatprep.subr.bf16.mxu0 0
    %205 = vmatpush1.bf16.msra.mxu0 0
    %206 = vmatprep.subr.bf16.mxu0 0
    %207 = vmatpush1.bf16.msra.mxu0 0
    %208 = vmatprep.subr.bf16.mxu0 0
    %209 = vmatpush1.bf16.msra.mxu0 0
    %210 = vmatprep.mubr.bf16.mxu0 0
    %211 = vmatmul.mubr.bf16.gmra.mrb[0].mxu0 %v167
    %v212 = vpop.f32.mrb[0].mxu0
    %v213 = vadd.f32 0.0, %v212
    %v214 = vpop.f32.mrb[0].mxu0
    %v215 = vadd.f32 0.0, %v214
    %v216 = vpop.f32.mrb[0].mxu0
    %v217 = vadd.f32 0.0, %v216
    %v218 = vpop.f32.mrb[0].mxu0
    %v219 = vadd.f32 0.0, %v218
    %220 = vmatprep.mubr.bf16.mxu0 0
    %221 = vmatmul.mubr.bf16.gmra.mrb[0].mxu0 %v170
    %v222 = vpop.f32.mrb[0].mxu0
    %v223 = vadd.f32 0.0, %v222
    %v224 = vpop.f32.mrb[0].mxu0
    %v225 = vadd.f32 0.0, %v224
    %v226 = vpop.f32.mrb[0].mxu0
    %v227 = vadd.f32 0.0, %v226
    %v228 = vpop.f32.mrb[0].mxu0
    %v229 = vadd.f32 0.0, %v228
    %230 = vdwg.mxu0
    %s231 = scalar_lea.vmem [#allocation2], 64
    %232 = vst [vmem:[%s231] sm:$0xff] %v213
    %233 = vst [vmem:[%s231 + $0x8] sm:$0xff] %v215
    %234 = vst [vmem:[%s231 + $0x10] sm:$0xff] %v217
    %235 = vst [vmem:[%s231 + $0x18] sm:$0xff] %v219
    %236 = vst [vmem:[%s231 + $0x20] sm:$0xff] %v223
    %237 = vst [vmem:[%s231 + $0x28] sm:$0xff] %v225
    %238 = vst [vmem:[%s231 + $0x30] sm:$0xff] %v227
    %239 = vst [vmem:[%s231 + $0x38] sm:$0xff] %v229
    %v240 = vadd.f32 %v213, %v215
    %241 = vadd.xlane.f32.xlu0 %v240
    %v242 = vpop.xlane.xlu0 %241
    %v243 = vadd.f32 %v217, %v219
    %244 = vadd.xlane.f32.xlu0 %v243
    %v245 = vpop.xlane.xlu0 %244
    %v246 = vadd.f32 %v223, %v225
    %247 = vadd.xlane.f32.xlu0 %v246
    %v248 = vpop.xlane.xlu0 %247
    %v249 = vadd.f32 %v227, %v229
    %250 = vadd.xlane.f32.xlu0 %v249
    %v251 = vpop.xlane.xlu0 %250
    %v252 = vadd.f32 %v141, %v242
    %v253 = vadd.f32 %v142, %v245
    %v254 = vadd.f32 %v143, %v248
    %v255 = vadd.f32 %v144, %v251
    %v256 = vmul.f32 %v252, 0.001953125
    %v257 = vmul.f32 %v253, 0.001953125
    %v258 = vmul.f32 %v254, 0.001953125
    %v259 = vmul.f32 %v255, 0.001953125
    %v260 = vld [vmem:[#allocation2] sm:$0xff]
    %v261 = vld [vmem:[#allocation2 + $0x8] sm:$0xff]
    %v262 = vld [vmem:[#allocation2 + $0x10] sm:$0xff]
    %v263 = vld [vmem:[#allocation2 + $0x18] sm:$0xff]
    %v264 = vld [vmem:[#allocation2 + $0x20] sm:$0xff]
    %v265 = vld [vmem:[#allocation2 + $0x28] sm:$0xff]
    %v266 = vld [vmem:[#allocation2 + $0x30] sm:$0xff]
    %v267 = vld [vmem:[#allocation2 + $0x38] sm:$0xff]
    %v268 = vsub.f32 %v260, %v256
    %v269 = vsub.f32 %v261, %v256
    %v270 = vsub.f32 %v262, %v257
    %v271 = vsub.f32 %v263, %v257
    %v272 = vsub.f32 %v264, %v258
    %v273 = vsub.f32 %v265, %v258
    %v274 = vsub.f32 %v266, %v259
    %v275 = vsub.f32 %v267, %v259
    %v276 = vmul.f32 %v268, %v268
    %v277 = vmul.f32 %v269, %v269
    %v278 = vmul.f32 %v270, %v270
    %v279 = vmul.f32 %v271, %v271
    %v280 = vmul.f32 %v272, %v272
    %v281 = vmul.f32 %v273, %v273
    %v282 = vmul.f32 %v274, %v274
    %v283 = vmul.f32 %v275, %v275
    %v284 = vadd.f32 %v276, %v277
    %285 = vadd.xlane.f32.xlu0 %v284
    %v286 = vpop.xlane.xlu0 %285
    %v287 = vadd.f32 %v278, %v279
    %288 = vadd.xlane.f32.xlu0 %v287
    %v289 = vpop.xlane.xlu0 %288
    %v290 = vadd.f32 %v280, %v281
    %291 = vadd.xlane.f32.xlu0 %v290
    %v292 = vpop.xlane.xlu0 %291
    %v293 = vadd.f32 %v282, %v283
    %294 = vadd.xlane.f32.xlu0 %v293
    %v295 = vpop.xlane.xlu0 %294
    %v296 = vadd.f32 %v286, 0.0
    %v297 = vadd.f32 %v289, 0.0
    %v298 = vadd.f32 %v292, 0.0
    %v299 = vadd.f32 %v295, 0.0
    %v300 = vld [vmem:[%s231] sm:$0xff]
    %v301 = vld [vmem:[%s231 + $0x8] sm:$0xff]
    %v302 = vld [vmem:[%s231 + $0x10] sm:$0xff]
    %v303 = vld [vmem:[%s231 + $0x18] sm:$0xff]
    %v304 = vld [vmem:[%s231 + $0x20] sm:$0xff]
    %v305 = vld [vmem:[%s231 + $0x28] sm:$0xff]
    %v306 = vld [vmem:[%s231 + $0x30] sm:$0xff]
    %v307 = vld [vmem:[%s231 + $0x38] sm:$0xff]
    %v308 = vsub.f32 %v300, %v256
    %v309 = vsub.f32 %v301, %v256
    %v310 = vsub.f32 %v302, %v257
    %v311 = vsub.f32 %v303, %v257
    %v312 = vsub.f32 %v304, %v258
    %v313 = vsub.f32 %v305, %v258
    %v314 = vsub.f32 %v306, %v259
    %v315 = vsub.f32 %v307, %v259
    %v316 = vmul.f32 %v308, %v308
    %v317 = vmul.f32 %v309, %v309
    %v318 = vmul.f32 %v310, %v310
    %v319 = vmul.f32 %v311, %v311
    %v320 = vmul.f32 %v312, %v312
    %v321 = vmul.f32 %v313, %v313
    %v322 = vmul.f32 %v314, %v314
    %v323 = vmul.f32 %v315, %v315
    %v324 = vadd.f32 %v316, %v317
    %325 = vadd.xlane.f32.xlu0 %v324
    %v326 = vpop.xlane.xlu0 %325
    %v327 = vadd.f32 %v318, %v319
    %328 = vadd.xlane.f32.xlu0 %v327
    %v329 = vpop.xlane.xlu0 %328
    %v330 = vadd.f32 %v320, %v321
    %331 = vadd.xlane.f32.xlu0 %v330
    %v332 = vpop.xlane.xlu0 %331
    %v333 = vadd.f32 %v322, %v323
    %334 = vadd.xlane.f32.xlu0 %v333
    %v335 = vpop.xlane.xlu0 %334
    %v336 = vadd.f32 %v296, %v326
    %v337 = vadd.f32 %v297, %v329
    %v338 = vadd.f32 %v298, %v332
    %v339 = vadd.f32 %v299, %v335
    %v340 = vld [vmem:[%s4] sm:$0xff]
    %v341 = vld [vmem:[%s4 + $0x8] sm:$0xff]
    %v342 = vld [vmem:[%s4 + $0x10] sm:$0xff]
    %v343 = vld [vmem:[%s4 + $0x18] sm:$0xff]
    %v344 = vmul.f32 %v336, 0.001953125
    %v345 = vmul.f32 %v337, 0.001953125
    %v346 = vmul.f32 %v338, 0.001953125
    %v347 = vmul.f32 %v339, 0.001953125
    %v348 = vadd.f32 %v344, 1e-05
    %v349 = vadd.f32 %v345, 1e-05
    %v350 = vadd.f32 %v346, 1e-05
    %v351 = vadd.f32 %v347, 1e-05
    %v352 = vrsqrt.pop %v348
    %v353 = vrsqrt.pop %v349
    %v354 = vrsqrt.pop %v350
    %v355 = vrsqrt.pop %v351
    %v356 = vmul.f32 %v340, %v352
    %v357 = vmul.f32 %v341, %v353
    %v358 = vmul.f32 %v342, %v354
    %v359 = vmul.f32 %v343, %v355
    %v360 = vld [vmem:[%s5] sm:$0xff]
    %v361 = vld [vmem:[%s5 + $0x8] sm:$0xff]
    %v362 = vld [vmem:[%s5 + $0x10] sm:$0xff]
    %v363 = vld [vmem:[%s5 + $0x18] sm:$0xff]
    %v364 = vmul.f32 %v256, %v356
    %v365 = vmul.f32 %v257, %v357
    %v366 = vmul.f32 %v258, %v358
    %v367 = vmul.f32 %v259, %v359
    %v368 = vsub.f32 %v360, %v364
    %v369 = vsub.f32 %v361, %v365
    %v370 = vsub.f32 %v362, %v366
    %v371 = vsub.f32 %v363, %v367
    %373 = vset.pattern.permute.xlu0 0
    %374 = vperm.xlu0 %373, %v356
    %v375 = vpop.permute.xlu0 %374
    %378 = vset.pattern.permute.xlu0 0
    %379 = vperm.xlu0 %378, %v357
    %v380 = vpop.permute.xlu0 %379
    %383 = vset.pattern.permute.xlu0 0
    %384 = vperm.xlu0 %383, %v358
    %v385 = vpop.permute.xlu0 %384
    %388 = vset.pattern.permute.xlu0 0
    %389 = vperm.xlu0 %388, %v359
    %v390 = vpop.permute.xlu0 %389
    %v392 = vmul.f32 %v260, %v375
    %v393 = vmul.f32 %v261, %v375
    %v394 = vmul.f32 %v262, %v380
    %v395 = vmul.f32 %v263, %v380
    %v396 = vmul.f32 %v264, %v385
    %v397 = vmul.f32 %v265, %v385
    %v398 = vmul.f32 %v266, %v390
    %v399 = vmul.f32 %v267, %v390
    %401 = vset.pattern.permute.xlu0 0
    %402 = vperm.xlu0 %401, %v368
    %v403 = vpop.permute.xlu0 %402
    %406 = vset.pattern.permute.xlu0 0
    %407 = vperm.xlu0 %406, %v369
    %v408 = vpop.permute.xlu0 %407
    %411 = vset.pattern.permute.xlu0 0
    %412 = vperm.xlu0 %411, %v370
    %v413 = vpop.permute.xlu0 %412
    %416 = vset.pattern.permute.xlu0 0
    %417 = vperm.xlu0 %416, %v371
    %v418 = vpop.permute.xlu0 %417
    %v420 = vadd.f32 %v392, %v403
    %v421 = vadd.f32 %v393, %v403
    %v422 = vadd.f32 %v394, %v408
    %v423 = vadd.f32 %v395, %v408
    %v424 = vadd.f32 %v396, %v413
    %v425 = vadd.f32 %v397, %v413
    %v426 = vadd.f32 %v398, %v418
    %v427 = vadd.f32 %v399, %v418
    %v428 = vmax.f32 %v420, 0.0
    %v429 = vmax.f32 %v421, 0.0
    %v430 = vmax.f32 %v422, 0.0
    %v431 = vmax.f32 %v423, 0.0
    %v432 = vmax.f32 %v424, 0.0
    %v433 = vmax.f32 %v425, 0.0
    %v434 = vmax.f32 %v426, 0.0
    %v435 = vmax.f32 %v427, 0.0
    %v436 = vpack.c.bf16 %v430, %v428
    %v437 = vpack.c.bf16 %v431, %v429
    %v438 = vpack.c.bf16 %v434, %v432
    %v439 = vpack.c.bf16 %v435, %v433
    %v440 = vld [vmem:[%s2] sm:$0xf]
    %v441 = vld [vmem:[%s2 + $0x4] sm:$0xf]
    %v442 = vld [vmem:[%s2 + $0x8] sm:$0xf]
    %v443 = vld [vmem:[%s2 + $0xc] sm:$0xf]
    %v448 = vunpack.c.l.b16 %v440
    %v449 = vunpack.c.l.b16 %v441
    %v450 = vunpack.c.l.b16 %v442
    %v451 = vunpack.c.l.b16 %v443
    %v452 = vpack.c.b16 %v449, %v448
    %v453 = vpack.c.b16 %v451, %v450
    %vm454 = vcmask 261120
    %v456 = vsel %vm454, %v452, 0
    %v459 = vsel %vm454, %v453, 0
    %461 = vmatprep.subr.bf16.mxu0 %v437
    %462 = vmatpush1.bf16.msra.mxu0 %v436
    %463 = vmatprep.subr.bf16.mxu0 %v439
    %464 = vmatpush1.bf16.msra.mxu0 %v438
    %465 = vmatprep.subr.bf16.mxu0 0
    %466 = vmatpush1.bf16.msra.mxu0 0
    %467 = vmatprep.subr.bf16.mxu0 0
    %468 = vmatpush1.bf16.msra.mxu0 0
    %469 = vmatprep.subr.bf16.mxu0 0
    %470 = vmatpush1.bf16.msra.mxu0 0
    %471 = vmatprep.subr.bf16.mxu0 0
    %472 = vmatpush1.bf16.msra.mxu0 0
    %473 = vmatprep.subr.bf16.mxu0 0
    %474 = vmatpush1.bf16.msra.mxu0 0
    %475 = vmatprep.subr.bf16.mxu0 0
    %476 = vmatpush1.bf16.msra.mxu0 0
    %477 = vmatprep.subr.bf16.mxu0 0
    %478 = vmatpush1.bf16.msra.mxu0 0
    %479 = vmatprep.subr.bf16.mxu0 0
    %480 = vmatpush1.bf16.msra.mxu0 0
    %481 = vmatprep.subr.bf16.mxu0 0
    %482 = vmatpush1.bf16.msra.mxu0 0
    %483 = vmatprep.subr.bf16.mxu0 0
    %484 = vmatpush1.bf16.msra.mxu0 0
    %485 = vmatprep.subr.bf16.mxu0 0
    %486 = vmatpush1.bf16.msra.mxu0 0
    %487 = vmatprep.subr.bf16.mxu0 0
    %488 = vmatpush1.bf16.msra.mxu0 0
    %489 = vmatprep.subr.bf16.mxu0 0
    %490 = vmatpush1.bf16.msra.mxu0 0
    %491 = vmatprep.subr.bf16.mxu0 0
    %492 = vmatpush1.bf16.msra.mxu0 0
    %493 = vmatprep.mubr.bf16.mxu0 0
    %494 = vmatmul.mubr.bf16.gmra.mrb[0].mxu0 %v456
    %v495 = vpop.f32.mrb[0].mxu0
    %v496 = vadd.f32 0.0, %v495
    %v497 = vpop.f32.mrb[0].mxu0
    %v498 = vadd.f32 0.0, %v497
    %v499 = vpop.f32.mrb[0].mxu0
    %v500 = vadd.f32 0.0, %v499
    %v501 = vpop.f32.mrb[0].mxu0
    %v502 = vadd.f32 0.0, %v501
    %503 = vmatprep.mubr.bf16.mxu0 0
    %504 = vmatmul.mubr.bf16.gmra.mrb[0].mxu0 %v459
    %v505 = vpop.f32.mrb[0].mxu0
    %v506 = vadd.f32 0.0, %v505
    %v507 = vpop.f32.mrb[0].mxu0
    %v508 = vadd.f32 0.0, %v507
    %v509 = vpop.f32.mrb[0].mxu0
    %v510 = vadd.f32 0.0, %v509
    %v511 = vpop.f32.mrb[0].mxu0
    %v512 = vadd.f32 0.0, %v511
    %513 = vdwg.mxu0
    %514 = vst [vmem:[#allocation3] sm:$0xff] %v496
    %515 = vst [vmem:[#allocation3 + $0x8] sm:$0xff] %v498
    %516 = vst [vmem:[#allocation3 + $0x10] sm:$0xff] %v500
    %517 = vst [vmem:[#allocation3 + $0x18] sm:$0xff] %v502
    %518 = vst [vmem:[#allocation3 + $0x20] sm:$0xff] %v506
    %519 = vst [vmem:[#allocation3 + $0x28] sm:$0xff] %v508
    %520 = vst [vmem:[#allocation3 + $0x30] sm:$0xff] %v510
    %521 = vst [vmem:[#allocation3 + $0x38] sm:$0xff] %v512
    %v522 = vadd.f32 %v496, %v498
    %523 = vadd.xlane.f32.xlu0 %v522
    %v524 = vpop.xlane.xlu0 %523
    %v525 = vadd.f32 %v500, %v502
    %526 = vadd.xlane.f32.xlu0 %v525
    %v527 = vpop.xlane.xlu0 %526
    %v528 = vadd.f32 %v506, %v508
    %529 = vadd.xlane.f32.xlu0 %v528
    %v530 = vpop.xlane.xlu0 %529
    %v531 = vadd.f32 %v510, %v512
    %532 = vadd.xlane.f32.xlu0 %v531
    %v533 = vpop.xlane.xlu0 %532
    %v534 = vadd.f32 %v524, 0.0
    %v535 = vadd.f32 %v527, 0.0
    %v536 = vadd.f32 %v530, 0.0
    %v537 = vadd.f32 %v533, 0.0
    %v538 = vld [vmem:[%s231] sm:$0xff]
    %v539 = vld [vmem:[%s231 + $0x8] sm:$0xff]
    %v540 = vld [vmem:[%s231 + $0x10] sm:$0xff]
    %v541 = vld [vmem:[%s231 + $0x18] sm:$0xff]
    %v542 = vld [vmem:[%s231 + $0x20] sm:$0xff]
    %v543 = vld [vmem:[%s231 + $0x28] sm:$0xff]
    %v544 = vld [vmem:[%s231 + $0x30] sm:$0xff]
    %v545 = vld [vmem:[%s231 + $0x38] sm:$0xff]
    %v546 = vmul.f32 %v538, %v375
    %v547 = vmul.f32 %v539, %v375
    %v548 = vmul.f32 %v540, %v380
    %v549 = vmul.f32 %v541, %v380
    %v550 = vmul.f32 %v542, %v385
    %v551 = vmul.f32 %v543, %v385
    %v552 = vmul.f32 %v544, %v390
    %v553 = vmul.f32 %v545, %v390
    %v554 = vadd.f32 %v546, %v403
    %v555 = vadd.f32 %v547, %v403
    %v556 = vadd.f32 %v548, %v408
    %v557 = vadd.f32 %v549, %v408
    %v558 = vadd.f32 %v550, %v413
    %v559 = vadd.f32 %v551, %v413
    %v560 = vadd.f32 %v552, %v418
    %v561 = vadd.f32 %v553, %v418
    %v562 = vmax.f32 %v554, 0.0
    %v563 = vmax.f32 %v555, 0.0
    %v564 = vmax.f32 %v556, 0.0
    %v565 = vmax.f32 %v557, 0.0
    %v566 = vmax.f32 %v558, 0.0
    %v567 = vmax.f32 %v559, 0.0
    %v568 = vmax.f32 %v560, 0.0
    %v569 = vmax.f32 %v561, 0.0
    %v570 = vpack.c.bf16 %v564, %v562
    %v571 = vpack.c.bf16 %v565, %v563
    %v572 = vpack.c.bf16 %v568, %v566
    %v573 = vpack.c.bf16 %v569, %v567
    %v574 = vld [vmem:[%s2] sm:$0xf]
    %v575 = vld [vmem:[%s2 + $0x4] sm:$0xf]
    %v576 = vld [vmem:[%s2 + $0x8] sm:$0xf]
    %v577 = vld [vmem:[%s2 + $0xc] sm:$0xf]
    %v582 = vunpack.c.l.b16 %v574
    %v583 = vunpack.c.l.b16 %v575
    %v584 = vunpack.c.l.b16 %v576
    %v585 = vunpack.c.l.b16 %v577
    %v586 = vpack.c.b16 %v583, %v582
    %v587 = vpack.c.b16 %v585, %v584
    %v589 = vsel %vm454, %v586, 0
    %v592 = vsel %vm454, %v587, 0
    %594 = vmatprep.subr.bf16.mxu0 %v571
    %595 = vmatpush1.bf16.msra.mxu0 %v570
    %596 = vmatprep.subr.bf16.mxu0 %v573
    %597 = vmatpush1.bf16.msra.mxu0 %v572
    %598 = vmatprep.subr.bf16.mxu0 0
    %599 = vmatpush1.bf16.msra.mxu0 0
    %600 = vmatprep.subr.bf16.mxu0 0
    %601 = vmatpush1.bf16.msra.mxu0 0
    %602 = vmatprep.subr.bf16.mxu0 0
    %603 = vmatpush1.bf16.msra.mxu0 0
    %604 = vmatprep.subr.bf16.mxu0 0
    %605 = vmatpush1.bf16.msra.mxu0 0
    %606 = vmatprep.subr.bf16.mxu0 0
    %607 = vmatpush1.bf16.msra.mxu0 0
    %608 = vmatprep.subr.bf16.mxu0 0
    %609 = vmatpush1.bf16.msra.mxu0 0
    %610 = vmatprep.subr.bf16.mxu0 0
    %611 = vmatpush1.bf16.msra.mxu0 0
    %612 = vmatprep.subr.bf16.mxu0 0
    %613 = vmatpush1.bf16.msra.mxu0 0
    %614 = vmatprep.subr.bf16.mxu0 0
    %615 = vmatpush1.bf16.msra.mxu0 0
    %616 = vmatprep.subr.bf16.mxu0 0
    %617 = vmatpush1.bf16.msra.mxu0 0
    %618 = vmatprep.subr.bf16.mxu0 0
    %619 = vmatpush1.bf16.msra.mxu0 0
    %620 = vmatprep.subr.bf16.mxu0 0
    %621 = vmatpush1.bf16.msra.mxu0 0
    %622 = vmatprep.subr.bf16.mxu0 0
    %623 = vmatpush1.bf16.msra.mxu0 0
    %624 = vmatprep.subr.bf16.mxu0 0
    %625 = vmatpush1.bf16.msra.mxu0 0
    %626 = vmatprep.mubr.bf16.mxu0 0
    %627 = vmatmul.mubr.bf16.gmra.mrb[0].mxu0 %v589
    %v628 = vpop.f32.mrb[0].mxu0
    %v629 = vadd.f32 0.0, %v628
    %v630 = vpop.f32.mrb[0].mxu0
    %v631 = vadd.f32 0.0, %v630
    %v632 = vpop.f32.mrb[0].mxu0
    %v633 = vadd.f32 0.0, %v632
    %v634 = vpop.f32.mrb[0].mxu0
    %v635 = vadd.f32 0.0, %v634
    %636 = vmatprep.mubr.bf16.mxu0 0
    %637 = vmatmul.mubr.bf16.gmra.mrb[0].mxu0 %v592
    %v638 = vpop.f32.mrb[0].mxu0
    %v639 = vadd.f32 0.0, %v638
    %v640 = vpop.f32.mrb[0].mxu0
    %v641 = vadd.f32 0.0, %v640
    %v642 = vpop.f32.mrb[0].mxu0
    %v643 = vadd.f32 0.0, %v642
    %v644 = vpop.f32.mrb[0].mxu0
    %v645 = vadd.f32 0.0, %v644
    %646 = vdwg.mxu0
    %s647 = scalar_lea.vmem [#allocation3], 64
    %648 = vst [vmem:[%s647] sm:$0xff] %v629
    %649 = vst [vmem:[%s647 + $0x8] sm:$0xff] %v631
    %650 = vst [vmem:[%s647 + $0x10] sm:$0xff] %v633
    %651 = vst [vmem:[%s647 + $0x18] sm:$0xff] %v635
    %652 = vst [vmem:[%s647 + $0x20] sm:$0xff] %v639
    %653 = vst [vmem:[%s647 + $0x28] sm:$0xff] %v641
    %654 = vst [vmem:[%s647 + $0x30] sm:$0xff] %v643
    %655 = vst [vmem:[%s647 + $0x38] sm:$0xff] %v645
    %v656 = vadd.f32 %v629, %v631
    %657 = vadd.xlane.f32.xlu0 %v656
    %v658 = vpop.xlane.xlu0 %657
    %v659 = vadd.f32 %v633, %v635
    %660 = vadd.xlane.f32.xlu0 %v659
    %v661 = vpop.xlane.xlu0 %660
    %v662 = vadd.f32 %v639, %v641
    %663 = vadd.xlane.f32.xlu0 %v662
    %v664 = vpop.xlane.xlu0 %663
    %v665 = vadd.f32 %v643, %v645
    %666 = vadd.xlane.f32.xlu0 %v665
    %v667 = vpop.xlane.xlu0 %666
    %v668 = vadd.f32 %v534, %v658
    %v669 = vadd.f32 %v535, %v661
    %v670 = vadd.f32 %v536, %v664
    %v671 = vadd.f32 %v537, %v667
    %v672 = vmul.f32 %v668, 0.001953125
    %v673 = vmul.f32 %v669, 0.001953125
    %v674 = vmul.f32 %v670, 0.001953125
    %v675 = vmul.f32 %v671, 0.001953125
    %v676 = vld [vmem:[#allocation3] sm:$0xff]
    %v677 = vld [vmem:[#allocation3 + $0x8] sm:$0xff]
    %v678 = vld [vmem:[#allocation3 + $0x10] sm:$0xff]
    %v679 = vld [vmem:[#allocation3 + $0x18] sm:$0xff]
    %v680 = vld [vmem:[#allocation3 + $0x20] sm:$0xff]
    %v681 = vld [vmem:[#allocation3 + $0x28] sm:$0xff]
    %v682 = vld [vmem:[#allocation3 + $0x30] sm:$0xff]
    %v683 = vld [vmem:[#allocation3 + $0x38] sm:$0xff]
    %v684 = vsub.f32 %v676, %v672
    %v685 = vsub.f32 %v677, %v672
    %v686 = vsub.f32 %v678, %v673
    %v687 = vsub.f32 %v679, %v673
    %v688 = vsub.f32 %v680, %v674
    %v689 = vsub.f32 %v681, %v674
    %v690 = vsub.f32 %v682, %v675
    %v691 = vsub.f32 %v683, %v675
    %v692 = vmul.f32 %v684, %v684
    %v693 = vmul.f32 %v685, %v685
    %v694 = vmul.f32 %v686, %v686
    %v695 = vmul.f32 %v687, %v687
    %v696 = vmul.f32 %v688, %v688
    %v697 = vmul.f32 %v689, %v689
    %v698 = vmul.f32 %v690, %v690
    %v699 = vmul.f32 %v691, %v691
    %v700 = vadd.f32 %v692, %v693
    %701 = vadd.xlane.f32.xlu0 %v700
    %v702 = vpop.xlane.xlu0 %701
    %v703 = vadd.f32 %v694, %v695
    %704 = vadd.xlane.f32.xlu0 %v703
    %v705 = vpop.xlane.xlu0 %704
    %v706 = vadd.f32 %v696, %v697
    %707 = vadd.xlane.f32.xlu0 %v706
    %v708 = vpop.xlane.xlu0 %707
    %v709 = vadd.f32 %v698, %v699
    %710 = vadd.xlane.f32.xlu0 %v709
    %v711 = vpop.xlane.xlu0 %710
    %v712 = vadd.f32 %v702, 0.0
    %v713 = vadd.f32 %v705, 0.0
    %v714 = vadd.f32 %v708, 0.0
    %v715 = vadd.f32 %v711, 0.0
    %v716 = vld [vmem:[%s647] sm:$0xff]
    %v717 = vld [vmem:[%s647 + $0x8] sm:$0xff]
    %v718 = vld [vmem:[%s647 + $0x10] sm:$0xff]
    %v719 = vld [vmem:[%s647 + $0x18] sm:$0xff]
    %v720 = vld [vmem:[%s647 + $0x20] sm:$0xff]
    %v721 = vld [vmem:[%s647 + $0x28] sm:$0xff]
    %v722 = vld [vmem:[%s647 + $0x30] sm:$0xff]
    %v723 = vld [vmem:[%s647 + $0x38] sm:$0xff]
    %v724 = vsub.f32 %v716, %v672
    %v725 = vsub.f32 %v717, %v672
    %v726 = vsub.f32 %v718, %v673
    %v727 = vsub.f32 %v719, %v673
    %v728 = vsub.f32 %v720, %v674
    %v729 = vsub.f32 %v721, %v674
    %v730 = vsub.f32 %v722, %v675
    %v731 = vsub.f32 %v723, %v675
    %v732 = vmul.f32 %v724, %v724
    %v733 = vmul.f32 %v725, %v725
    %v734 = vmul.f32 %v726, %v726
    %v735 = vmul.f32 %v727, %v727
    %v736 = vmul.f32 %v728, %v728
    %v737 = vmul.f32 %v729, %v729
    %v738 = vmul.f32 %v730, %v730
    %v739 = vmul.f32 %v731, %v731
    %v740 = vadd.f32 %v732, %v733
    %741 = vadd.xlane.f32.xlu0 %v740
    %v742 = vpop.xlane.xlu0 %741
    %v743 = vadd.f32 %v734, %v735
    %744 = vadd.xlane.f32.xlu0 %v743
    %v745 = vpop.xlane.xlu0 %744
    %v746 = vadd.f32 %v736, %v737
    %747 = vadd.xlane.f32.xlu0 %v746
    %v748 = vpop.xlane.xlu0 %747
    %v749 = vadd.f32 %v738, %v739
    %750 = vadd.xlane.f32.xlu0 %v749
    %v751 = vpop.xlane.xlu0 %750
    %v752 = vadd.f32 %v712, %v742
    %v753 = vadd.f32 %v713, %v745
    %v754 = vadd.f32 %v714, %v748
    %v755 = vadd.f32 %v715, %v751
    %v756 = vld [vmem:[%s6] sm:$0xff]
    %v757 = vld [vmem:[%s6 + $0x8] sm:$0xff]
    %v758 = vld [vmem:[%s6 + $0x10] sm:$0xff]
    %v759 = vld [vmem:[%s6 + $0x18] sm:$0xff]
    %v760 = vmul.f32 %v752, 0.001953125
    %v761 = vmul.f32 %v753, 0.001953125
    %v762 = vmul.f32 %v754, 0.001953125
    %v763 = vmul.f32 %v755, 0.001953125
    %v764 = vadd.f32 %v760, 1e-05
    %v765 = vadd.f32 %v761, 1e-05
    %v766 = vadd.f32 %v762, 1e-05
    %v767 = vadd.f32 %v763, 1e-05
    %v768 = vrsqrt.pop %v764
    %v769 = vrsqrt.pop %v765
    %v770 = vrsqrt.pop %v766
    %v771 = vrsqrt.pop %v767
    %v772 = vmul.f32 %v756, %v768
    %v773 = vmul.f32 %v757, %v769
    %v774 = vmul.f32 %v758, %v770
    %v775 = vmul.f32 %v759, %v771
    %v776 = vld [vmem:[%s7] sm:$0xff]
    %v777 = vld [vmem:[%s7 + $0x8] sm:$0xff]
    %v778 = vld [vmem:[%s7 + $0x10] sm:$0xff]
    %v779 = vld [vmem:[%s7 + $0x18] sm:$0xff]
    %v780 = vmul.f32 %v672, %v772
    %v781 = vmul.f32 %v673, %v773
    %v782 = vmul.f32 %v674, %v774
    %v783 = vmul.f32 %v675, %v775
    %v784 = vsub.f32 %v776, %v780
    %v785 = vsub.f32 %v777, %v781
    %v786 = vsub.f32 %v778, %v782
    %v787 = vsub.f32 %v779, %v783
    %789 = vset.pattern.permute.xlu0 0
    %790 = vperm.xlu0 %789, %v772
    %v791 = vpop.permute.xlu0 %790
    %794 = vset.pattern.permute.xlu0 0
    %795 = vperm.xlu0 %794, %v773
    %v796 = vpop.permute.xlu0 %795
    %799 = vset.pattern.permute.xlu0 0
    %800 = vperm.xlu0 %799, %v774
    %v801 = vpop.permute.xlu0 %800
    %804 = vset.pattern.permute.xlu0 0
    %805 = vperm.xlu0 %804, %v775
    %v806 = vpop.permute.xlu0 %805
    %v808 = vmul.f32 %v676, %v791
    %v809 = vmul.f32 %v677, %v791
    %v810 = vmul.f32 %v678, %v796
    %v811 = vmul.f32 %v679, %v796
    %v812 = vmul.f32 %v680, %v801
    %v813 = vmul.f32 %v681, %v801
    %v814 = vmul.f32 %v682, %v806
    %v815 = vmul.f32 %v683, %v806
    %817 = vset.pattern.permute.xlu0 0
    %818 = vperm.xlu0 %817, %v784
    %v819 = vpop.permute.xlu0 %818
    %822 = vset.pattern.permute.xlu0 0
    %823 = vperm.xlu0 %822, %v785
    %v824 = vpop.permute.xlu0 %823
    %827 = vset.pattern.permute.xlu0 0
    %828 = vperm.xlu0 %827, %v786
    %v829 = vpop.permute.xlu0 %828
    %832 = vset.pattern.permute.xlu0 0
    %833 = vperm.xlu0 %832, %v787
    %v834 = vpop.permute.xlu0 %833
    %v836 = vadd.f32 %v808, %v819
    %v837 = vadd.f32 %v809, %v819
    %v838 = vadd.f32 %v810, %v824
    %v839 = vadd.f32 %v811, %v824
    %v840 = vadd.f32 %v812, %v829
    %v841 = vadd.f32 %v813, %v829
    %v842 = vadd.f32 %v814, %v834
    %v843 = vadd.f32 %v815, %v834
    %v844 = vmax.f32 %v836, 0.0
    %v845 = vmax.f32 %v837, 0.0
    %v846 = vmax.f32 %v838, 0.0
    %v847 = vmax.f32 %v839, 0.0
    %v848 = vmax.f32 %v840, 0.0
    %v849 = vmax.f32 %v841, 0.0
    %v850 = vmax.f32 %v842, 0.0
    %v851 = vmax.f32 %v843, 0.0
    %v852 = vpack.c.bf16 %v846, %v844
    %v853 = vpack.c.bf16 %v847, %v845
    %v854 = vpack.c.bf16 %v850, %v848
    %v855 = vpack.c.bf16 %v851, %v849
    %v856 = vld [vmem:[%s3] sm:$0xf]
    %v857 = vld [vmem:[%s8] sm:$0xff]
    %859 = vset.pattern.permute.xlu0 0
    %860 = vperm.xlu0 %859, %v857
    %v861 = vpop.permute.xlu0 %860
    %v864 = vsel %vm454, %v856, 0
    %866 = vmatprep.subr.bf16.mxu0 %v853
    %867 = vmatpush1.bf16.msra.mxu0 %v852
    %868 = vmatprep.subr.bf16.mxu0 %v855
    %869 = vmatpush1.bf16.msra.mxu0 %v854
    %870 = vmatprep.subr.bf16.mxu0 0
    %871 = vmatpush1.bf16.msra.mxu0 0
    %872 = vmatprep.subr.bf16.mxu0 0
    %873 = vmatpush1.bf16.msra.mxu0 0
    %874 = vmatprep.subr.bf16.mxu0 0
    %875 = vmatpush1.bf16.msra.mxu0 0
    %876 = vmatprep.subr.bf16.mxu0 0
    %877 = vmatpush1.bf16.msra.mxu0 0
    %878 = vmatprep.subr.bf16.mxu0 0
    %879 = vmatpush1.bf16.msra.mxu0 0
    %880 = vmatprep.subr.bf16.mxu0 0
    %881 = vmatpush1.bf16.msra.mxu0 0
    %882 = vmatprep.subr.bf16.mxu0 0
    %883 = vmatpush1.bf16.msra.mxu0 0
    %884 = vmatprep.subr.bf16.mxu0 0
    %885 = vmatpush1.bf16.msra.mxu0 0
    %886 = vmatprep.subr.bf16.mxu0 0
    %887 = vmatpush1.bf16.msra.mxu0 0
    %888 = vmatprep.subr.bf16.mxu0 0
    %889 = vmatpush1.bf16.msra.mxu0 0
    %890 = vmatprep.subr.bf16.mxu0 0
    %891 = vmatpush1.bf16.msra.mxu0 0
    %892 = vmatprep.subr.bf16.mxu0 0
    %893 = vmatpush1.bf16.msra.mxu0 0
    %894 = vmatprep.subr.bf16.mxu0 0
    %895 = vmatpush1.bf16.msra.mxu0 0
    %896 = vmatprep.subr.bf16.mxu0 0
    %897 = vmatpush1.bf16.msra.mxu0 0
    %898 = vmatprep.mubr.bf16.mxu0 0
    %899 = vmatmul.mubr.bf16.gmra.mrb[0].mxu0 %v864
    %v900 = vpop.f32.mrb[0].mxu0
    %v901 = vadd.f32 %v861, %v900
    %v902 = vpop.f32.mrb[0].mxu0
    %v903 = vadd.f32 %v861, %v902
    %v904 = vpop.f32.mrb[0].mxu0
    %v905 = vpop.f32.mrb[0].mxu0
    %906 = vdwg.mxu0
    %907 = vst [vmem:[#allocation4] sm:$0xff] %v901
    %908 = vst [vmem:[#allocation4 + $0x8] sm:$0xff] %v903
    %v909 = vld [vmem:[%s647] sm:$0xff]
    %v910 = vld [vmem:[%s647 + $0x8] sm:$0xff]
    %v911 = vld [vmem:[%s647 + $0x10] sm:$0xff]
    %v912 = vld [vmem:[%s647 + $0x18] sm:$0xff]
    %v913 = vld [vmem:[%s647 + $0x20] sm:$0xff]
    %v914 = vld [vmem:[%s647 + $0x28] sm:$0xff]
    %v915 = vld [vmem:[%s647 + $0x30] sm:$0xff]
    %v916 = vld [vmem:[%s647 + $0x38] sm:$0xff]
    %v917 = vmul.f32 %v909, %v791
    %v918 = vmul.f32 %v910, %v791
    %v919 = vmul.f32 %v911, %v796
    %v920 = vmul.f32 %v912, %v796
    %v921 = vmul.f32 %v913, %v801
    %v922 = vmul.f32 %v914, %v801
    %v923 = vmul.f32 %v915, %v806
    %v924 = vmul.f32 %v916, %v806
    %v925 = vadd.f32 %v917, %v819
    %v926 = vadd.f32 %v918, %v819
    %v927 = vadd.f32 %v919, %v824
    %v928 = vadd.f32 %v920, %v824
    %v929 = vadd.f32 %v921, %v829
    %v930 = vadd.f32 %v922, %v829
    %v931 = vadd.f32 %v923, %v834
    %v932 = vadd.f32 %v924, %v834
    %v933 = vmax.f32 %v925, 0.0
    %v934 = vmax.f32 %v926, 0.0
    %v935 = vmax.f32 %v927, 0.0
    %v936 = vmax.f32 %v928, 0.0
    %v937 = vmax.f32 %v929, 0.0
    %v938 = vmax.f32 %v930, 0.0
    %v939 = vmax.f32 %v931, 0.0
    %v940 = vmax.f32 %v932, 0.0
    %v941 = vpack.c.bf16 %v935, %v933
    %v942 = vpack.c.bf16 %v936, %v934
    %v943 = vpack.c.bf16 %v939, %v937
    %v944 = vpack.c.bf16 %v940, %v938
    %v945 = vld [vmem:[%s3] sm:$0xf]
    %v946 = vld [vmem:[%s8] sm:$0xff]
    %948 = vset.pattern.permute.xlu0 0
    %949 = vperm.xlu0 %948, %v946
    %v950 = vpop.permute.xlu0 %949
    %v953 = vsel %vm454, %v945, 0
    %955 = vmatprep.subr.bf16.mxu0 %v942
    %956 = vmatpush1.bf16.msra.mxu0 %v941
    %957 = vmatprep.subr.bf16.mxu0 %v944
    %958 = vmatpush1.bf16.msra.mxu0 %v943
    %959 = vmatprep.subr.bf16.mxu0 0
    %960 = vmatpush1.bf16.msra.mxu0 0
    %961 = vmatprep.subr.bf16.mxu0 0
    %962 = vmatpush1.bf16.msra.mxu0 0
    %963 = vmatprep.subr.bf16.mxu0 0
    %964 = vmatpush1.bf16.msra.mxu0 0
    %965 = vmatprep.subr.bf16.mxu0 0
    %966 = vmatpush1.bf16.msra.mxu0 0
    %967 = vmatprep.subr.bf16.mxu0 0
    %968 = vmatpush1.bf16.msra.mxu0 0
    %969 = vmatprep.subr.bf16.mxu0 0
    %970 = vmatpush1.bf16.msra.mxu0 0
    %971 = vmatprep.subr.bf16.mxu0 0
    %972 = vmatpush1.bf16.msra.mxu0 0
    %973 = vmatprep.subr.bf16.mxu0 0
    %974 = vmatpush1.bf16.msra.mxu0 0
    %975 = vmatprep.subr.bf16.mxu0 0
    %976 = vmatpush1.bf16.msra.mxu0 0
    %977 = vmatprep.subr.bf16.mxu0 0
    %978 = vmatpush1.bf16.msra.mxu0 0
    %979 = vmatprep.subr.bf16.mxu0 0
    %980 = vmatpush1.bf16.msra.mxu0 0
    %981 = vmatprep.subr.bf16.mxu0 0
    %982 = vmatpush1.bf16.msra.mxu0 0
    %983 = vmatprep.subr.bf16.mxu0 0
    %984 = vmatpush1.bf16.msra.mxu0 0
    %985 = vmatprep.subr.bf16.mxu0 0
    %986 = vmatpush1.bf16.msra.mxu0 0
    %987 = vmatprep.mubr.bf16.mxu0 0
    %988 = vmatmul.mubr.bf16.gmra.mrb[0].mxu0 %v953
    %v989 = vpop.f32.mrb[0].mxu0
    %v990 = vadd.f32 %v950, %v989
    %v991 = vpop.f32.mrb[0].mxu0
    %v992 = vadd.f32 %v950, %v991
    %v993 = vpop.f32.mrb[0].mxu0
    %v994 = vpop.f32.mrb[0].mxu0
    %995 = vdwg.mxu0
    %s996 = scalar_lea.vmem [#allocation4], 16
    %997 = vst [vmem:[%s996] sm:$0xff] %v990
    %998 = vst [vmem:[%s996 + $0x8] sm:$0xff] %v992
    // Predicated region
    $region38: #{tpu_custom_call.1} parent=1 // pred_check
      _
    $region39: #{tpu_custom_call.1} parent=1 // pred_check_branch
      %1000 = sbr.rel (0) target = $region41
    $region40: #{tpu_custom_call.1} parent=1 // pred_region
      %s1002 = ssub.s32 512, 512
      %1003 = vsyncadd [#allocation5], %s1002
      %s1004 = sshll.u32 [#allocation4], 4
      %s1005 = int_to_ptr.vmem [resolvable:$true] %s1004
      %1010 = dma.vmem_to_hbm [thread:$0]  %s1005, 512, %s9, [#allocation5], 256, 256, 16
    $region41: #{tpu_custom_call.1} parent=1 // pred_fallthru
      _
    // Predicated region
    $region42: #{tpu_custom_call.1} parent=1 // pred_check
      _
    $region43: #{tpu_custom_call.1} parent=1 // pred_check_branch
      %1012 = sbr.rel (0) target = $region45
    $region44: #{tpu_custom_call.1} parent=1 // pred_region
      %1013 = dma.done [#allocation5], 512
    $region45: #{tpu_custom_call.1} parent=1 // pred_fallthru
      _
    %1014 = vsyncpa [#allocation5], 1

</llo_original>
